<compile_context>
chip_gen: v7x
topology: tpu7x:2x2x1
jax: 0.10.0
libtpu: 0.0.40
codegen_flags: <defaults>
</compile_context>

<pallas_src>
import jax
import jax.numpy as jnp
from jax.experimental import pallas as pl
from jax.experimental.pallas import tpu as pltpu


NB_QUBITS = 2  # default hp; kernel hard-codes the exact 2-qubit simulation


def _quanv_kernel(x_ref, wenc_ref, trig_ref, o_ref):
    """Lane-dense quantum-convolution tile.

    x_ref:    (F, TR, 128) bf16/f32  patch features; patch index = (row, lane)
    wenc_ref: (2*F,)       f32 SMEM  0.5 * encoding weights [w[:,0] ; w[:,1]]
    trig_ref: (4,)         f32 SMEM  cos(t0/2), sin(t0/2), cos(t1/2), sin(t1/2)
    o_ref:    (2, TR, 128)           <Z_0>, <Z_1> per patch
    """
    f_dim = x_ref.shape[0]

    # --- angle encoding: unrolled VPU multiply-adds over the small feature
    # axis (no MXU push for a 2-column matmul).  Upcast bf16 -> f32 on load.
    x0 = x_ref[0].astype(jnp.float32)
    a = x0 * wenc_ref[0]
    b = x0 * wenc_ref[f_dim]
    for f in range(1, f_dim):
        xf = x_ref[f].astype(jnp.float32)
        a = a + xf * wenc_ref[f]
        b = b + xf * wenc_ref[f_dim + f]

    ca, sa = jnp.cos(a), jnp.sin(a)
    cb, sb = jnp.cos(b), jnp.sin(b)

    # |psi> = CNOT(q0->q1) (RY(2a) (x) RY(2b)) |00>; real amplitudes, order |q0 q1>
    p00 = ca * cb
    p01 = ca * sb
    p10 = sa * sb
    p11 = sa * cb

    cc = trig_ref[0]
    sc = trig_ref[1]
    cd = trig_ref[2]
    sd = trig_ref[3]
    # variational RY on q1
    q00 = cd * p00 - sd * p01
    q01 = sd * p00 + cd * p01
    q10 = cd * p10 - sd * p11
    q11 = sd * p10 + cd * p11
    # variational RY on q0
    r00 = cc * q00 - sc * q10
    r10 = sc * q00 + cc * q10
    r01 = cc * q01 - sc * q11
    r11 = sc * q01 + cc * q11

    pr00 = r00 * r00
    pr01 = r01 * r01
    pr10 = r10 * r10
    pr11 = r11 * r11
    # direct lane-dense slab stores (no concatenate, no masked vst)
    o_ref[0] = (pr00 + pr01 - pr10 - pr11).astype(o_ref.dtype)   # <Z> on qubit 0
    o_ref[1] = (pr00 - pr01 + pr10 - pr11).astype(o_ref.dtype)   # <Z> on qubit 1


def _prepare_layer_params(w_enc, theta):
    """Fold the 0.5 half-angle factor into the weights; precompute theta trig."""
    w_enc = w_enc.astype(jnp.float32)
    theta = theta.astype(jnp.float32)
    w_flat = (0.5 * w_enc).T.reshape(-1)               # (2*F,) = [0.5*w[:,0], 0.5*w[:,1]]
    half = 0.5 * theta
    trig = jnp.stack([jnp.cos(half[0]), jnp.sin(half[0]),
                      jnp.cos(half[1]), jnp.sin(half[1])])
    return w_flat, trig


def _quanv_layer_cfirst(x_cnhw, w_flat, trig, kernel_size, tile_rows,
                        act_dtype, out_dtype):
    """One quantum conv layer on channel-first (C, N, H, W) activations.

    Returns (NB_QUBITS, N, Hout, Wout) so stacked layers never round-trip
    through an NCHW relayout in HBM.
    """
    c, n, h, w = x_cnhw.shape
    kh, kw = kernel_size
    hout, wout = h // kh, w // kw
    f = c * kh * kw
    p = n * hout * wout

    # non-overlapping patches, feature-major: (F, P) with the patch axis last
    patches = x_cnhw.reshape(c, n, hout, kh, wout, kw)
    patches = patches.transpose(0, 3, 5, 1, 2, 4).reshape(f, p)

    # fold the patch axis into (rows, 128) so kernel intermediates are dense slabs
    rows = pl.cdiv(p, 128)
    rows16 = 16 * pl.cdiv(rows, 16)
    tr = max(16, min(16 * pl.cdiv(tile_rows, 16), rows16))   # multiple of 16 (bf16 tiling)
    rows_pad = pl.cdiv(rows, tr) * tr
    p_pad = rows_pad * 128

    patches = jnp.pad(patches, ((0, 0), (0, p_pad - p)))
    patches = patches.astype(act_dtype).reshape(f, rows_pad, 128)

    out = pl.pallas_call(
        _quanv_kernel,
        out_shape=jax.ShapeDtypeStruct((NB_QUBITS, rows_pad, 128), out_dtype),
        grid_spec=pltpu.PrefetchScalarGridSpec(
            num_scalar_prefetch=0,
            grid=(rows_pad // tr,),
            in_specs=[
                pl.BlockSpec((f, tr, 128), lambda i: (0, i, 0)),      # patch slab
                pl.BlockSpec(memory_space=pltpu.MemorySpace.SMEM),    # encoding weights
                pl.BlockSpec(memory_space=pltpu.MemorySpace.SMEM),    # theta trig
            ],
            out_specs=pl.BlockSpec((NB_QUBITS, tr, 128), lambda i: (0, i, 0)),
        ),
        compiler_params=pltpu.CompilerParams(
            dimension_semantics=("parallel",)),
    )(patches, w_flat, trig)

    out = out.reshape(NB_QUBITS, p_pad)[:, :p]
    return out.reshape(NB_QUBITS, n, hout, wout)


def quantum_conv_layer(x_nchw, w_enc, theta, kernel_size=(2, 2), tile_rows=32):
    """Stand-alone layer: (N, C, H, W) -> (N, NB_QUBITS, H//kh, W//kw)."""
    w_flat, trig = _prepare_layer_params(w_enc, theta)
    y = _quanv_layer_cfirst(jnp.transpose(x_nchw, (1, 0, 2, 3)), w_flat, trig,
                            kernel_size, tile_rows,
                            act_dtype=jnp.bfloat16, out_dtype=jnp.float32)
    return jnp.transpose(y, (1, 0, 2, 3))


def quantum_backbone(x_nchw, params, kernel_size=(2, 2), tile_rows=32):
    """Equivalent of QuantumBackbone.forward: sequential quantum conv layers.

    Internally stays channel-first (C, N, H, W) with bf16 activations between
    layers; transposes to/from NCHW exactly once.
    """
    x = jnp.transpose(x_nchw, (1, 0, 2, 3))  # NCHW -> (C, N, H, W), once
    n_layers = len(params)
    for li, (w_enc, theta) in enumerate(params):
        w_flat, trig = _prepare_layer_params(w_enc, theta)
        last = li == n_layers - 1
        x = _quanv_layer_cfirst(x, w_flat, trig, kernel_size, tile_rows,
                                act_dtype=jnp.bfloat16,
                                out_dtype=jnp.float32 if last else jnp.bfloat16)
    return jnp.transpose(x, (1, 0, 2, 3))    # back to NCHW, once


def init_backbone_params(input_shape, kernel_size=(2, 2), nb_qubits=NB_QUBITS,
                         nb_q_conv_layer=1, seed=0):
    """Deterministic per-layer parameters: (encoding weights, variational angles)."""
    assert nb_qubits == NB_QUBITS, "kernel hard-codes the default nb_qubits=2"
    c = input_shape[0]
    key = jax.random.PRNGKey(seed)
    params = []
    cin = c
    for _ in range(nb_q_conv_layer):
        f = cin * kernel_size[0] * kernel_size[1]
        key, k1, k2 = jax.random.split(key, 3)
        w_enc = 0.5 * jax.random.normal(k1, (f, nb_qubits), jnp.float32)
        theta = jax.random.uniform(k2, (nb_qubits,), jnp.float32, 0.0, jnp.pi)
        params.append((w_enc, theta))
        cin = nb_qubits
    return params


if __name__ == "__main__":
    # hp defaults: kernel_size=(2,2), nb_qubits=2; 2 layers to exercise nn.Sequential
    N, C, H, W = 2, 4, 16, 16
    kernel_size = (2, 2)
    nb_q_conv_layer = 2

    key = jax.random.PRNGKey(0)
    x = jax.random.normal(key, (N, C, H, W), jnp.float32)

    params = init_backbone_params((C, H, W), kernel_size=kernel_size,
                                  nb_q_conv_layer=nb_q_conv_layer, seed=0)

    y = quantum_backbone(x, params, kernel_size)
    y = jax.block_until_ready(y)

    expected = (N, NB_QUBITS,
                H // (kernel_size[0] ** nb_q_conv_layer),
                W // (kernel_size[1] ** nb_q_conv_layer))
    assert y.shape == expected, (y.shape, expected)
    assert bool(jnp.all(jnp.isfinite(y)))
    # Pauli-Z expectations are bounded in [-1, 1]
    assert bool(jnp.all(jnp.abs(y) <= 1.0 + 1e-5))
    print("KERNEL_OK")
</pallas_src>

<mosaic_0001>
module attributes {stable_mosaic.version = 11 : i64} {
  func.func @_quanv_kernel(%arg0: i32, %arg1: memref<16x16x128xbf16, #tpu.memory_space<vmem>>, %arg2: memref<32xf32, #tpu.memory_space<smem>>, %arg3: memref<4xf32, #tpu.memory_space<smem>>, %arg4: memref<2x16x128xbf16, #tpu.memory_space<vmem>>) attributes {dimension_semantics = [#tpu.dimension_semantics<parallel>], iteration_bounds = array<i64: 1>, scalar_prefetch = 0 : i64, scratch_operands = 0 : i64, tpu.core_type = #tpu.core_type<tc>, window_params = [{transform_indices = @transform_0, window_bounds = array<i64: 16, 16, 128>}, {transform_indices = @transform_1, window_bounds = array<i64: 32>}, {transform_indices = @transform_2, window_bounds = array<i64: 4>}, {transform_indices = @transform_3, window_bounds = array<i64: 2, 16, 128>}]} {
    %c0 = arith.constant 0 : index
    %c0_0 = arith.constant 0 : index
    %c0_1 = arith.constant 0 : index
    %0 = vector.load %arg1[%c0, %c0_0, %c0_1] : memref<16x16x128xbf16, #tpu.memory_space<vmem>>, vector<1x16x128xbf16>
    %1 = vector.shape_cast %0 : vector<1x16x128xbf16> to vector<16x128xbf16>
    %2 = arith.extf %1 : vector<16x128xbf16> to vector<16x128xf32>
    %c0_2 = arith.constant 0 : index
    %3 = memref.load %arg2[%c0_2] : memref<32xf32, #tpu.memory_space<smem>>
    %4 = vector.broadcast %3 : f32 to vector<16x128xf32>
    %5 = arith.mulf %2, %4 : vector<16x128xf32>
    %c16 = arith.constant 16 : index
    %6 = memref.load %arg2[%c16] : memref<32xf32, #tpu.memory_space<smem>>
    %7 = vector.broadcast %6 : f32 to vector<16x128xf32>
    %8 = arith.mulf %2, %7 : vector<16x128xf32>
    %c1 = arith.constant 1 : index
    %c0_3 = arith.constant 0 : index
    %c0_4 = arith.constant 0 : index
    %9 = vector.load %arg1[%c1, %c0_3, %c0_4] : memref<16x16x128xbf16, #tpu.memory_space<vmem>>, vector<1x16x128xbf16>
    %10 = vector.shape_cast %9 : vector<1x16x128xbf16> to vector<16x128xbf16>
    %11 = arith.extf %10 : vector<16x128xbf16> to vector<16x128xf32>
    %c1_5 = arith.constant 1 : index
    %12 = memref.load %arg2[%c1_5] : memref<32xf32, #tpu.memory_space<smem>>
    %13 = vector.broadcast %12 : f32 to vector<16x128xf32>
    %14 = arith.mulf %11, %13 : vector<16x128xf32>
    %15 = arith.addf %5, %14 : vector<16x128xf32>
    %c17 = arith.constant 17 : index
    %16 = memref.load %arg2[%c17] : memref<32xf32, #tpu.memory_space<smem>>
    %17 = vector.broadcast %16 : f32 to vector<16x128xf32>
    %18 = arith.mulf %11, %17 : vector<16x128xf32>
    %19 = arith.addf %8, %18 : vector<16x128xf32>
    %c2 = arith.constant 2 : index
    %c0_6 = arith.constant 0 : index
    %c0_7 = arith.constant 0 : index
    %20 = vector.load %arg1[%c2, %c0_6, %c0_7] : memref<16x16x128xbf16, #tpu.memory_space<vmem>>, vector<1x16x128xbf16>
    %21 = vector.shape_cast %20 : vector<1x16x128xbf16> to vector<16x128xbf16>
    %22 = arith.extf %21 : vector<16x128xbf16> to vector<16x128xf32>
    %c2_8 = arith.constant 2 : index
    %23 = memref.load %arg2[%c2_8] : memref<32xf32, #tpu.memory_space<smem>>
    %24 = vector.broadcast %23 : f32 to vector<16x128xf32>
    %25 = arith.mulf %22, %24 : vector<16x128xf32>
    %26 = arith.addf %15, %25 : vector<16x128xf32>
    %c18 = arith.constant 18 : index
    %27 = memref.load %arg2[%c18] : memref<32xf32, #tpu.memory_space<smem>>
    %28 = vector.broadcast %27 : f32 to vector<16x128xf32>
    %29 = arith.mulf %22, %28 : vector<16x128xf32>
    %30 = arith.addf %19, %29 : vector<16x128xf32>
    %c3 = arith.constant 3 : index
    %c0_9 = arith.constant 0 : index
    %c0_10 = arith.constant 0 : index
    %31 = vector.load %arg1[%c3, %c0_9, %c0_10] : memref<16x16x128xbf16, #tpu.memory_space<vmem>>, vector<1x16x128xbf16>
    %32 = vector.shape_cast %31 : vector<1x16x128xbf16> to vector<16x128xbf16>
    %33 = arith.extf %32 : vector<16x128xbf16> to vector<16x128xf32>
    %c3_11 = arith.constant 3 : index
    %34 = memref.load %arg2[%c3_11] : memref<32xf32, #tpu.memory_space<smem>>
    %35 = vector.broadcast %34 : f32 to vector<16x128xf32>
    %36 = arith.mulf %33, %35 : vector<16x128xf32>
    %37 = arith.addf %26, %36 : vector<16x128xf32>
    %c19 = arith.constant 19 : index
    %38 = memref.load %arg2[%c19] : memref<32xf32, #tpu.memory_space<smem>>
    %39 = vector.broadcast %38 : f32 to vector<16x128xf32>
    %40 = arith.mulf %33, %39 : vector<16x128xf32>
    %41 = arith.addf %30, %40 : vector<16x128xf32>
    %c4 = arith.constant 4 : index
    %c0_12 = arith.constant 0 : index
    %c0_13 = arith.constant 0 : index
    %42 = vector.load %arg1[%c4, %c0_12, %c0_13] : memref<16x16x128xbf16, #tpu.memory_space<vmem>>, vector<1x16x128xbf16>
    %43 = vector.shape_cast %42 : vector<1x16x128xbf16> to vector<16x128xbf16>
    %44 = arith.extf %43 : vector<16x128xbf16> to vector<16x128xf32>
    %c4_14 = arith.constant 4 : index
    %45 = memref.load %arg2[%c4_14] : memref<32xf32, #tpu.memory_space<smem>>
    %46 = vector.broadcast %45 : f32 to vector<16x128xf32>
    %47 = arith.mulf %44, %46 : vector<16x128xf32>
    %48 = arith.addf %37, %47 : vector<16x128xf32>
    %c20 = arith.constant 20 : index
    %49 = memref.load %arg2[%c20] : memref<32xf32, #tpu.memory_space<smem>>
    %50 = vector.broadcast %49 : f32 to vector<16x128xf32>
    %51 = arith.mulf %44, %50 : vector<16x128xf32>
    %52 = arith.addf %41, %51 : vector<16x128xf32>
    %c5 = arith.constant 5 : index
    %c0_15 = arith.constant 0 : index
    %c0_16 = arith.constant 0 : index
    %53 = vector.load %arg1[%c5, %c0_15, %c0_16] : memref<16x16x128xbf16, #tpu.memory_space<vmem>>, vector<1x16x128xbf16>
    %54 = vector.shape_cast %53 : vector<1x16x128xbf16> to vector<16x128xbf16>
    %55 = arith.extf %54 : vector<16x128xbf16> to vector<16x128xf32>
    %c5_17 = arith.constant 5 : index
    %56 = memref.load %arg2[%c5_17] : memref<32xf32, #tpu.memory_space<smem>>
    %57 = vector.broadcast %56 : f32 to vector<16x128xf32>
    %58 = arith.mulf %55, %57 : vector<16x128xf32>
    %59 = arith.addf %48, %58 : vector<16x128xf32>
    %c21 = arith.constant 21 : index
    %60 = memref.load %arg2[%c21] : memref<32xf32, #tpu.memory_space<smem>>
    %61 = vector.broadcast %60 : f32 to vector<16x128xf32>
    %62 = arith.mulf %55, %61 : vector<16x128xf32>
    %63 = arith.addf %52, %62 : vector<16x128xf32>
    %c6 = arith.constant 6 : index
    %c0_18 = arith.constant 0 : index
    %c0_19 = arith.constant 0 : index
    %64 = vector.load %arg1[%c6, %c0_18, %c0_19] : memref<16x16x128xbf16, #tpu.memory_space<vmem>>, vector<1x16x128xbf16>
    %65 = vector.shape_cast %64 : vector<1x16x128xbf16> to vector<16x128xbf16>
    %66 = arith.extf %65 : vector<16x128xbf16> to vector<16x128xf32>
    %c6_20 = arith.constant 6 : index
    %67 = memref.load %arg2[%c6_20] : memref<32xf32, #tpu.memory_space<smem>>
    %68 = vector.broadcast %67 : f32 to vector<16x128xf32>
    %69 = arith.mulf %66, %68 : vector<16x128xf32>
    %70 = arith.addf %59, %69 : vector<16x128xf32>
    %c22 = arith.constant 22 : index
    %71 = memref.load %arg2[%c22] : memref<32xf32, #tpu.memory_space<smem>>
    %72 = vector.broadcast %71 : f32 to vector<16x128xf32>
    %73 = arith.mulf %66, %72 : vector<16x128xf32>
    %74 = arith.addf %63, %73 : vector<16x128xf32>
    %c7 = arith.constant 7 : index
    %c0_21 = arith.constant 0 : index
    %c0_22 = arith.constant 0 : index
    %75 = vector.load %arg1[%c7, %c0_21, %c0_22] : memref<16x16x128xbf16, #tpu.memory_space<vmem>>, vector<1x16x128xbf16>
    %76 = vector.shape_cast %75 : vector<1x16x128xbf16> to vector<16x128xbf16>
    %77 = arith.extf %76 : vector<16x128xbf16> to vector<16x128xf32>
    %c7_23 = arith.constant 7 : index
    %78 = memref.load %arg2[%c7_23] : memref<32xf32, #tpu.memory_space<smem>>
    %79 = vector.broadcast %78 : f32 to vector<16x128xf32>
    %80 = arith.mulf %77, %79 : vector<16x128xf32>
    %81 = arith.addf %70, %80 : vector<16x128xf32>
    %c23 = arith.constant 23 : index
    %82 = memref.load %arg2[%c23] : memref<32xf32, #tpu.memory_space<smem>>
    %83 = vector.broadcast %82 : f32 to vector<16x128xf32>
    %84 = arith.mulf %77, %83 : vector<16x128xf32>
    %85 = arith.addf %74, %84 : vector<16x128xf32>
    %c8 = arith.constant 8 : index
    %c0_24 = arith.constant 0 : index
    %c0_25 = arith.constant 0 : index
    %86 = vector.load %arg1[%c8, %c0_24, %c0_25] : memref<16x16x128xbf16, #tpu.memory_space<vmem>>, vector<1x16x128xbf16>
    %87 = vector.shape_cast %86 : vector<1x16x128xbf16> to vector<16x128xbf16>
    %88 = arith.extf %87 : vector<16x128xbf16> to vector<16x128xf32>
    %c8_26 = arith.constant 8 : index
    %89 = memref.load %arg2[%c8_26] : memref<32xf32, #tpu.memory_space<smem>>
    %90 = vector.broadcast %89 : f32 to vector<16x128xf32>
    %91 = arith.mulf %88, %90 : vector<16x128xf32>
    %92 = arith.addf %81, %91 : vector<16x128xf32>
    %c24 = arith.constant 24 : index
    %93 = memref.load %arg2[%c24] : memref<32xf32, #tpu.memory_space<smem>>
    %94 = vector.broadcast %93 : f32 to vector<16x128xf32>
    %95 = arith.mulf %88, %94 : vector<16x128xf32>
    %96 = arith.addf %85, %95 : vector<16x128xf32>
    %c9 = arith.constant 9 : index
    %c0_27 = arith.constant 0 : index
    %c0_28 = arith.constant 0 : index
    %97 = vector.load %arg1[%c9, %c0_27, %c0_28] : memref<16x16x128xbf16, #tpu.memory_space<vmem>>, vector<1x16x128xbf16>
    %98 = vector.shape_cast %97 : vector<1x16x128xbf16> to vector<16x128xbf16>
    %99 = arith.extf %98 : vector<16x128xbf16> to vector<16x128xf32>
    %c9_29 = arith.constant 9 : index
    %100 = memref.load %arg2[%c9_29] : memref<32xf32, #tpu.memory_space<smem>>
    %101 = vector.broadcast %100 : f32 to vector<16x128xf32>
    %102 = arith.mulf %99, %101 : vector<16x128xf32>
    %103 = arith.addf %92, %102 : vector<16x128xf32>
    %c25 = arith.constant 25 : index
    %104 = memref.load %arg2[%c25] : memref<32xf32, #tpu.memory_space<smem>>
    %105 = vector.broadcast %104 : f32 to vector<16x128xf32>
    %106 = arith.mulf %99, %105 : vector<16x128xf32>
    %107 = arith.addf %96, %106 : vector<16x128xf32>
    %c10 = arith.constant 10 : index
    %c0_30 = arith.constant 0 : index
    %c0_31 = arith.constant 0 : index
    %108 = vector.load %arg1[%c10, %c0_30, %c0_31] : memref<16x16x128xbf16, #tpu.memory_space<vmem>>, vector<1x16x128xbf16>
    %109 = vector.shape_cast %108 : vector<1x16x128xbf16> to vector<16x128xbf16>
    %110 = arith.extf %109 : vector<16x128xbf16> to vector<16x128xf32>
    %c10_32 = arith.constant 10 : index
    %111 = memref.load %arg2[%c10_32] : memref<32xf32, #tpu.memory_space<smem>>
    %112 = vector.broadcast %111 : f32 to vector<16x128xf32>
    %113 = arith.mulf %110, %112 : vector<16x128xf32>
    %114 = arith.addf %103, %113 : vector<16x128xf32>
    %c26 = arith.constant 26 : index
    %115 = memref.load %arg2[%c26] : memref<32xf32, #tpu.memory_space<smem>>
    %116 = vector.broadcast %115 : f32 to vector<16x128xf32>
    %117 = arith.mulf %110, %116 : vector<16x128xf32>
    %118 = arith.addf %107, %117 : vector<16x128xf32>
    %c11 = arith.constant 11 : index
    %c0_33 = arith.constant 0 : index
    %c0_34 = arith.constant 0 : index
    %119 = vector.load %arg1[%c11, %c0_33, %c0_34] : memref<16x16x128xbf16, #tpu.memory_space<vmem>>, vector<1x16x128xbf16>
    %120 = vector.shape_cast %119 : vector<1x16x128xbf16> to vector<16x128xbf16>
    %121 = arith.extf %120 : vector<16x128xbf16> to vector<16x128xf32>
    %c11_35 = arith.constant 11 : index
    %122 = memref.load %arg2[%c11_35] : memref<32xf32, #tpu.memory_space<smem>>
    %123 = vector.broadcast %122 : f32 to vector<16x128xf32>
    %124 = arith.mulf %121, %123 : vector<16x128xf32>
    %125 = arith.addf %114, %124 : vector<16x128xf32>
    %c27 = arith.constant 27 : index
    %126 = memref.load %arg2[%c27] : memref<32xf32, #tpu.memory_space<smem>>
    %127 = vector.broadcast %126 : f32 to vector<16x128xf32>
    %128 = arith.mulf %121, %127 : vector<16x128xf32>
    %129 = arith.addf %118, %128 : vector<16x128xf32>
    %c12 = arith.constant 12 : index
    %c0_36 = arith.constant 0 : index
    %c0_37 = arith.constant 0 : index
    %130 = vector.load %arg1[%c12, %c0_36, %c0_37] : memref<16x16x128xbf16, #tpu.memory_space<vmem>>, vector<1x16x128xbf16>
    %131 = vector.shape_cast %130 : vector<1x16x128xbf16> to vector<16x128xbf16>
    %132 = arith.extf %131 : vector<16x128xbf16> to vector<16x128xf32>
    %c12_38 = arith.constant 12 : index
    %133 = memref.load %arg2[%c12_38] : memref<32xf32, #tpu.memory_space<smem>>
    %134 = vector.broadcast %133 : f32 to vector<16x128xf32>
    %135 = arith.mulf %132, %134 : vector<16x128xf32>
    %136 = arith.addf %125, %135 : vector<16x128xf32>
    %c28 = arith.constant 28 : index
    %137 = memref.load %arg2[%c28] : memref<32xf32, #tpu.memory_space<smem>>
    %138 = vector.broadcast %137 : f32 to vector<16x128xf32>
    %139 = arith.mulf %132, %138 : vector<16x128xf32>
    %140 = arith.addf %129, %139 : vector<16x128xf32>
    %c13 = arith.constant 13 : index
    %c0_39 = arith.constant 0 : index
    %c0_40 = arith.constant 0 : index
    %141 = vector.load %arg1[%c13, %c0_39, %c0_40] : memref<16x16x128xbf16, #tpu.memory_space<vmem>>, vector<1x16x128xbf16>
    %142 = vector.shape_cast %141 : vector<1x16x128xbf16> to vector<16x128xbf16>
    %143 = arith.extf %142 : vector<16x128xbf16> to vector<16x128xf32>
    %c13_41 = arith.constant 13 : index
    %144 = memref.load %arg2[%c13_41] : memref<32xf32, #tpu.memory_space<smem>>
    %145 = vector.broadcast %144 : f32 to vector<16x128xf32>
    %146 = arith.mulf %143, %145 : vector<16x128xf32>
    %147 = arith.addf %136, %146 : vector<16x128xf32>
    %c29 = arith.constant 29 : index
    %148 = memref.load %arg2[%c29] : memref<32xf32, #tpu.memory_space<smem>>
    %149 = vector.broadcast %148 : f32 to vector<16x128xf32>
    %150 = arith.mulf %143, %149 : vector<16x128xf32>
    %151 = arith.addf %140, %150 : vector<16x128xf32>
    %c14 = arith.constant 14 : index
    %c0_42 = arith.constant 0 : index
    %c0_43 = arith.constant 0 : index
    %152 = vector.load %arg1[%c14, %c0_42, %c0_43] : memref<16x16x128xbf16, #tpu.memory_space<vmem>>, vector<1x16x128xbf16>
    %153 = vector.shape_cast %152 : vector<1x16x128xbf16> to vector<16x128xbf16>
    %154 = arith.extf %153 : vector<16x128xbf16> to vector<16x128xf32>
    %c14_44 = arith.constant 14 : index
    %155 = memref.load %arg2[%c14_44] : memref<32xf32, #tpu.memory_space<smem>>
    %156 = vector.broadcast %155 : f32 to vector<16x128xf32>
    %157 = arith.mulf %154, %156 : vector<16x128xf32>
    %158 = arith.addf %147, %157 : vector<16x128xf32>
    %c30 = arith.constant 30 : index
    %159 = memref.load %arg2[%c30] : memref<32xf32, #tpu.memory_space<smem>>
    %160 = vector.broadcast %159 : f32 to vector<16x128xf32>
    %161 = arith.mulf %154, %160 : vector<16x128xf32>
    %162 = arith.addf %151, %161 : vector<16x128xf32>
    %c15 = arith.constant 15 : index
    %c0_45 = arith.constant 0 : index
    %c0_46 = arith.constant 0 : index
    %163 = vector.load %arg1[%c15, %c0_45, %c0_46] : memref<16x16x128xbf16, #tpu.memory_space<vmem>>, vector<1x16x128xbf16>
    %164 = vector.shape_cast %163 : vector<1x16x128xbf16> to vector<16x128xbf16>
    %165 = arith.extf %164 : vector<16x128xbf16> to vector<16x128xf32>
    %c15_47 = arith.constant 15 : index
    %166 = memref.load %arg2[%c15_47] : memref<32xf32, #tpu.memory_space<smem>>
    %167 = vector.broadcast %166 : f32 to vector<16x128xf32>
    %168 = arith.mulf %165, %167 : vector<16x128xf32>
    %169 = arith.addf %158, %168 : vector<16x128xf32>
    %c31 = arith.constant 31 : index
    %170 = memref.load %arg2[%c31] : memref<32xf32, #tpu.memory_space<smem>>
    %171 = vector.broadcast %170 : f32 to vector<16x128xf32>
    %172 = arith.mulf %165, %171 : vector<16x128xf32>
    %173 = arith.addf %162, %172 : vector<16x128xf32>
    %174 = math.cos %169 : vector<16x128xf32>
    %175 = math.sin %169 : vector<16x128xf32>
    %176 = math.cos %173 : vector<16x128xf32>
    %177 = math.sin %173 : vector<16x128xf32>
    %178 = arith.mulf %174, %176 : vector<16x128xf32>
    %179 = arith.mulf %174, %177 : vector<16x128xf32>
    %180 = arith.mulf %175, %177 : vector<16x128xf32>
    %181 = arith.mulf %175, %176 : vector<16x128xf32>
    %c0_48 = arith.constant 0 : index
    %182 = memref.load %arg3[%c0_48] : memref<4xf32, #tpu.memory_space<smem>>
    %c1_49 = arith.constant 1 : index
    %183 = memref.load %arg3[%c1_49] : memref<4xf32, #tpu.memory_space<smem>>
    %c2_50 = arith.constant 2 : index
    %184 = memref.load %arg3[%c2_50] : memref<4xf32, #tpu.memory_space<smem>>
    %c3_51 = arith.constant 3 : index
    %185 = memref.load %arg3[%c3_51] : memref<4xf32, #tpu.memory_space<smem>>
    %186 = vector.broadcast %184 : f32 to vector<16x128xf32>
    %187 = arith.mulf %186, %178 : vector<16x128xf32>
    %188 = vector.broadcast %185 : f32 to vector<16x128xf32>
    %189 = arith.mulf %188, %179 : vector<16x128xf32>
    %190 = arith.subf %187, %189 : vector<16x128xf32>
    %191 = vector.broadcast %185 : f32 to vector<16x128xf32>
    %192 = arith.mulf %191, %178 : vector<16x128xf32>
    %193 = vector.broadcast %184 : f32 to vector<16x128xf32>
    %194 = arith.mulf %193, %179 : vector<16x128xf32>
    %195 = arith.addf %192, %194 : vector<16x128xf32>
    %196 = vector.broadcast %184 : f32 to vector<16x128xf32>
    %197 = arith.mulf %196, %180 : vector<16x128xf32>
    %198 = vector.broadcast %185 : f32 to vector<16x128xf32>
    %199 = arith.mulf %198, %181 : vector<16x128xf32>
    %200 = arith.subf %197, %199 : vector<16x128xf32>
    %201 = vector.broadcast %185 : f32 to vector<16x128xf32>
    %202 = arith.mulf %201, %180 : vector<16x128xf32>
    %203 = vector.broadcast %184 : f32 to vector<16x128xf32>
    %204 = arith.mulf %203, %181 : vector<16x128xf32>
    %205 = arith.addf %202, %204 : vector<16x128xf32>
    %206 = vector.broadcast %182 : f32 to vector<16x128xf32>
    %207 = arith.mulf %206, %190 : vector<16x128xf32>
    %208 = vector.broadcast %183 : f32 to vector<16x128xf32>
    %209 = arith.mulf %208, %200 : vector<16x128xf32>
    %210 = arith.subf %207, %209 : vector<16x128xf32>
    %211 = vector.broadcast %183 : f32 to vector<16x128xf32>
    %212 = arith.mulf %211, %190 : vector<16x128xf32>
    %213 = vector.broadcast %182 : f32 to vector<16x128xf32>
    %214 = arith.mulf %213, %200 : vector<16x128xf32>
    %215 = arith.addf %212, %214 : vector<16x128xf32>
    %216 = vector.broadcast %182 : f32 to vector<16x128xf32>
    %217 = arith.mulf %216, %195 : vector<16x128xf32>
    %218 = vector.broadcast %183 : f32 to vector<16x128xf32>
    %219 = arith.mulf %218, %205 : vector<16x128xf32>
    %220 = arith.subf %217, %219 : vector<16x128xf32>
    %221 = vector.broadcast %183 : f32 to vector<16x128xf32>
    %222 = arith.mulf %221, %195 : vector<16x128xf32>
    %223 = vector.broadcast %182 : f32 to vector<16x128xf32>
    %224 = arith.mulf %223, %205 : vector<16x128xf32>
    %225 = arith.addf %222, %224 : vector<16x128xf32>
    %226 = arith.mulf %210, %210 : vector<16x128xf32>
    %227 = arith.mulf %220, %220 : vector<16x128xf32>
    %228 = arith.mulf %215, %215 : vector<16x128xf32>
    %229 = arith.mulf %225, %225 : vector<16x128xf32>
    %230 = arith.addf %226, %227 : vector<16x128xf32>
    %231 = arith.subf %230, %228 : vector<16x128xf32>
    %232 = arith.subf %231, %229 : vector<16x128xf32>
    %233 = arith.truncf %232 : vector<16x128xf32> to vector<16x128xbf16>
    %c0_52 = arith.constant 0 : index
    %c0_53 = arith.constant 0 : index
    %c0_54 = arith.constant 0 : index
    %234 = vector.load %arg4[%c0_52, %c0_53, %c0_54] : memref<2x16x128xbf16, #tpu.memory_space<vmem>>, vector<1x16x128xbf16>
    %235 = vector.shape_cast %234 : vector<1x16x128xbf16> to vector<16x128xbf16>
    %236 = vector.shape_cast %233 : vector<16x128xbf16> to vector<1x16x128xbf16>
    tpu.vector_store %arg4[%c0_52, %c0_53, %c0_54], %236 {strides = array<i32>} : memref<2x16x128xbf16, #tpu.memory_space<vmem>>, vector<1x16x128xbf16>,
    %237 = arith.subf %226, %227 : vector<16x128xf32>
    %238 = arith.addf %237, %228 : vector<16x128xf32>
    %239 = arith.subf %238, %229 : vector<16x128xf32>
    %240 = arith.truncf %239 : vector<16x128xf32> to vector<16x128xbf16>
    %c1_55 = arith.constant 1 : index
    %c0_56 = arith.constant 0 : index
    %c0_57 = arith.constant 0 : index
    %241 = vector.load %arg4[%c1_55, %c0_56, %c0_57] : memref<2x16x128xbf16, #tpu.memory_space<vmem>>, vector<1x16x128xbf16>
    %242 = vector.shape_cast %241 : vector<1x16x128xbf16> to vector<16x128xbf16>
    %243 = vector.shape_cast %240 : vector<16x128xbf16> to vector<1x16x128xbf16>
    tpu.vector_store %arg4[%c1_55, %c0_56, %c0_57], %243 {strides = array<i32>} : memref<2x16x128xbf16, #tpu.memory_space<vmem>>, vector<1x16x128xbf16>,
    return
  }
  func.func @transform_0(%arg0: i32) -> (i32, i32, i32) {
    %c0_i32 = arith.constant 0 : i32
    %c0_i32_0 = arith.constant 0 : i32
    %c0_i32_1 = arith.constant 0 : i32
    return %c0_i32, %arg0, %c0_i32_0 : i32, i32, i32
  }
  func.func @transform_1(%arg0: i32) -> i32 {
    %c0_i32 = arith.constant 0 : i32
    %c0_i32_0 = arith.constant 0 : i32
    return %c0_i32 : i32
  }
  func.func @transform_2(%arg0: i32) -> i32 {
    %c0_i32 = arith.constant 0 : i32
    %c0_i32_0 = arith.constant 0 : i32
    return %c0_i32 : i32
  }
  func.func @transform_3(%arg0: i32) -> (i32, i32, i32) {
    %c0_i32 = arith.constant 0 : i32
    %c0_i32_0 = arith.constant 0 : i32
    %c0_i32_1 = arith.constant 0 : i32
    return %c0_i32, %arg0, %c0_i32_0 : i32, i32, i32
  }
}

</mosaic_0001>

<llo_original>
// kernel: tpu_custom_call.1
$region0: #{tpu_custom_call.1}
  #allocation0 [shape = 'u32[]', space=smem, size = 0x4, offset = 0x4, fixed_abs, tag = 'smem constant byte address 0x4 - core index']
  #allocation1 [shape = 'u32[144,128]{1,0:T(1,128)}', space=vmem, size = 0x12000, scoped, tag = 'internal scratch']
  %s0 = inlined_call_operand.hbm [shape: bf16[16,16,128], index: 0, kind: input, shape index: {}]
  %s1 = inlined_call_operand.vmem [shape: f32[32], index: 1, kind: input, shape index: {}]
  %s2 = inlined_call_operand.vmem [shape: f32[4], index: 2, kind: input, shape index: {}]
  %s3 = inlined_call_operand.hbm [shape: bf16[2,16,128], index: 3, kind: output, shape index: {}]
  %s4 = sld [smem:[#allocation0]]
  $region34: #{tpu_custom_call.1} parent=0
    _
  %s6 = ssub.s32 1, %s4
  %s7 = scalar_select 0, %s6, %s4
  $region1: #{tpu_custom_call.1} parent=0
    #allocation2 [shape = 'u8[65536]{0}', space=vmem, size = 0x10000, scoped, tag = 'input window, operand 0, single buffered']
    #allocation3 [shape = 's32[1]{0}', space=sflag, size = 0x4, scoped, tag = 'scoped memory for tpu_custom_call.1']
    #allocation4 [shape = 's32[1]{0}', space=sflag, size = 0x4, scoped, tag = 'scoped memory for tpu_custom_call.1']
    #allocation5 [shape = 's32[1]{0}', space=sflag, size = 0x4, scoped, tag = 'scoped memory for tpu_custom_call.1']
    #allocation6 [shape = 'u8[512]{0}', space=smem, size = 0x200, scoped, tag = 'input window, operand 1, single buffered']
    #allocation7 [shape = 'u8[512]{0}', space=smem, size = 0x200, scoped, tag = 'input window, operand 2, single buffered']
    #allocation8 [shape = 's32[1]{0}', space=sflag, size = 0x4, scoped, tag = 'scoped memory for tpu_custom_call.1']
    #allocation9 [shape = 'u8[8192]{0}', space=vmem, size = 0x2000, scoped, tag = 'output window, operand 0, single buffered']
    %8 = vsyncpa [#allocation3], 0
    %9 = vsyncpa [#allocation5], 0
    %10 = vsyncpa [#allocation8], 0
    %11 = vsyncpa [#allocation4], 0
    // Predicated region
    $region2: #{tpu_custom_call.1} parent=1 // pred_check
      _
    $region3: #{tpu_custom_call.1} parent=1 // pred_check_branch
      %13 = sbr.rel (0) target = $region5
    $region4: #{tpu_custom_call.1} parent=1 // pred_region
      %s15 = ssub.s32 2048, 2048
      %16 = vsyncadd [#allocation3], %s15
      %s17 = sshll.u32 [#allocation2], 4
      %s18 = int_to_ptr.vmem [resolvable:$true] %s17
      %23 = dma.hbm_to_vmem [thread:$0]  %s0, 2048, %s18, [#allocation3], 64, 64, 4
    $region5: #{tpu_custom_call.1} parent=1 // pred_fallthru
      _
    // Predicated region
    $region6: #{tpu_custom_call.1} parent=1 // pred_check
      _
    $region7: #{tpu_custom_call.1} parent=1 // pred_check_branch
      %25 = sbr.rel (0) target = $region9
    $region8: #{tpu_custom_call.1} parent=1 // pred_region
      %s27 = ssub.s32 16, 16
      %28 = vsyncadd [#allocation5], %s27
      %s30 = sshll.u32 %s1, 4
      %s31 = int_to_ptr.vmem [resolvable:$true] %s30
      %33 = dma.vmem_to_smem %s31, 16, [#allocation6], [#allocation5]
    $region9: #{tpu_custom_call.1} parent=1 // pred_fallthru
      _
    // Predicated region
    $region10: #{tpu_custom_call.1} parent=1 // pred_check
      _
    $region11: #{tpu_custom_call.1} parent=1 // pred_check_branch
      %35 = sbr.rel (0) target = $region13
    $region12: #{tpu_custom_call.1} parent=1 // pred_region
      %s37 = ssub.s32 16, 16
      %38 = vsyncadd [#allocation8], %s37
      %s40 = sshll.u32 %s2, 4
      %s41 = int_to_ptr.vmem [resolvable:$true] %s40
      %43 = dma.vmem_to_smem %s41, 16, [#allocation7], [#allocation8]
    $region13: #{tpu_custom_call.1} parent=1 // pred_fallthru
      _
    // Predicated region
    $region14: #{tpu_custom_call.1} parent=1 // pred_check
      _
    $region15: #{tpu_custom_call.1} parent=1 // pred_check_branch
      %45 = sbr.rel (0) target = $region17
    $region16: #{tpu_custom_call.1} parent=1 // pred_region
      %46 = dma.done [#allocation3], 2048
    $region17: #{tpu_custom_call.1} parent=1 // pred_fallthru
      _
    // Predicated region
    $region18: #{tpu_custom_call.1} parent=1 // pred_check
      _
    $region19: #{tpu_custom_call.1} parent=1 // pred_check_branch
      %48 = sbr.rel (0) target = $region21
    $region20: #{tpu_custom_call.1} parent=1 // pred_region
      %49 = dma.done [#allocation5], 16
    $region21: #{tpu_custom_call.1} parent=1 // pred_fallthru
      _
    // Predicated region
    $region22: #{tpu_custom_call.1} parent=1 // pred_check
      _
    $region23: #{tpu_custom_call.1} parent=1 // pred_check_branch
      %51 = sbr.rel (0) target = $region25
    $region24: #{tpu_custom_call.1} parent=1 // pred_region
      %52 = dma.done [#allocation8], 16
    $region25: #{tpu_custom_call.1} parent=1 // pred_fallthru
      _
    %53 = sfence
    %v54 = vld [vmem:[#allocation2] sm:$0xf]
    %v55 = vld [vmem:[#allocation2 + $0x4] sm:$0xf]
    %v56 = vunpack.c.l.bf16 %v54
    %v57 = vunpack.c.l.bf16 %v55
    %s58 = sld [smem:[#allocation6]]
    %v59 = vstv %s58
    %v60 = vmul.f32 %v56, %v59
    %v61 = vmul.f32 %v57, %v59
    %s62 = sld [smem:[#allocation6 + $0x10]]
    %v63 = vstv %s62
    %v64 = vmul.f32 %v56, %v63
    %v65 = vmul.f32 %v57, %v63
    %s66 = scalar_lea.vmem [#allocation2], 8
    %v67 = vld [vmem:[%s66] sm:$0xf]
    %v68 = vld [vmem:[%s66 + $0x4] sm:$0xf]
    %v69 = vunpack.c.l.bf16 %v67
    %v70 = vunpack.c.l.bf16 %v68
    %s71 = sld [smem:[#allocation6 + $0x1]]
    %v72 = vstv %s71
    %v73 = vmul.f32 %v69, %v72
    %v74 = vmul.f32 %v70, %v72
    %v75 = vadd.f32 %v60, %v73
    %v76 = vadd.f32 %v61, %v74
    %s77 = sld [smem:[#allocation6 + $0x11]]
    %v78 = vstv %s77
    %v79 = vmul.f32 %v69, %v78
    %v80 = vmul.f32 %v70, %v78
    %v81 = vadd.f32 %v64, %v79
    %v82 = vadd.f32 %v65, %v80
    %s83 = scalar_lea.vmem [#allocation2], 16
    %v84 = vld [vmem:[%s83] sm:$0xf]
    %v85 = vld [vmem:[%s83 + $0x4] sm:$0xf]
    %v86 = vunpack.c.l.bf16 %v84
    %v87 = vunpack.c.l.bf16 %v85
    %s88 = sld [smem:[#allocation6 + $0x2]]
    %v89 = vstv %s88
    %v90 = vmul.f32 %v86, %v89
    %v91 = vmul.f32 %v87, %v89
    %v92 = vadd.f32 %v75, %v90
    %v93 = vadd.f32 %v76, %v91
    %s94 = sld [smem:[#allocation6 + $0x12]]
    %v95 = vstv %s94
    %v96 = vmul.f32 %v86, %v95
    %v97 = vmul.f32 %v87, %v95
    %v98 = vadd.f32 %v81, %v96
    %v99 = vadd.f32 %v82, %v97
    %s100 = scalar_lea.vmem [#allocation2], 24
    %v101 = vld [vmem:[%s100] sm:$0xf]
    %v102 = vld [vmem:[%s100 + $0x4] sm:$0xf]
    %v103 = vunpack.c.l.bf16 %v101
    %v104 = vunpack.c.l.bf16 %v102
    %s105 = sld [smem:[#allocation6 + $0x3]]
    %v106 = vstv %s105
    %v107 = vmul.f32 %v103, %v106
    %v108 = vmul.f32 %v104, %v106
    %v109 = vadd.f32 %v92, %v107
    %v110 = vadd.f32 %v93, %v108
    %s111 = sld [smem:[#allocation6 + $0x13]]
    %v112 = vstv %s111
    %v113 = vmul.f32 %v103, %v112
    %v114 = vmul.f32 %v104, %v112
    %v115 = vadd.f32 %v98, %v113
    %v116 = vadd.f32 %v99, %v114
    %s117 = scalar_lea.vmem [#allocation2], 32
    %v118 = vld [vmem:[%s117] sm:$0xf]
    %v119 = vld [vmem:[%s117 + $0x4] sm:$0xf]
    %v120 = vunpack.c.l.bf16 %v118
    %v121 = vunpack.c.l.bf16 %v119
    %s122 = sld [smem:[#allocation6 + $0x4]]
    %v123 = vstv %s122
    %v124 = vmul.f32 %v120, %v123
    %v125 = vmul.f32 %v121, %v123
    %v126 = vadd.f32 %v109, %v124
    %v127 = vadd.f32 %v110, %v125
    %s128 = sld [smem:[#allocation6 + $0x14]]
    %v129 = vstv %s128
    %v130 = vmul.f32 %v120, %v129
    %v131 = vmul.f32 %v121, %v129
    %v132 = vadd.f32 %v115, %v130
    %v133 = vadd.f32 %v116, %v131
    %s134 = scalar_lea.vmem [#allocation2], 40
    %v135 = vld [vmem:[%s134] sm:$0xf]
    %v136 = vld [vmem:[%s134 + $0x4] sm:$0xf]
    %v137 = vunpack.c.l.bf16 %v135
    %v138 = vunpack.c.l.bf16 %v136
    %s139 = sld [smem:[#allocation6 + $0x5]]
    %v140 = vstv %s139
    %v141 = vmul.f32 %v137, %v140
    %v142 = vmul.f32 %v138, %v140
    %v143 = vadd.f32 %v126, %v141
    %v144 = vadd.f32 %v127, %v142
    %s145 = sld [smem:[#allocation6 + $0x15]]
    %v146 = vstv %s145
    %v147 = vmul.f32 %v137, %v146
    %v148 = vmul.f32 %v138, %v146
    %v149 = vadd.f32 %v132, %v147
    %v150 = vadd.f32 %v133, %v148
    %s151 = scalar_lea.vmem [#allocation2], 48
    %v152 = vld [vmem:[%s151] sm:$0xf]
    %v153 = vld [vmem:[%s151 + $0x4] sm:$0xf]
    %v154 = vunpack.c.l.bf16 %v152
    %v155 = vunpack.c.l.bf16 %v153
    %s156 = sld [smem:[#allocation6 + $0x6]]
    %v157 = vstv %s156
    %v158 = vmul.f32 %v154, %v157
    %v159 = vmul.f32 %v155, %v157
    %v160 = vadd.f32 %v143, %v158
    %v161 = vadd.f32 %v144, %v159
    %s162 = sld [smem:[#allocation6 + $0x16]]
    %v163 = vstv %s162
    %v164 = vmul.f32 %v154, %v163
    %v165 = vmul.f32 %v155, %v163
    %v166 = vadd.f32 %v149, %v164
    %v167 = vadd.f32 %v150, %v165
    %s168 = scalar_lea.vmem [#allocation2], 56
    %v169 = vld [vmem:[%s168] sm:$0xf]
    %v170 = vld [vmem:[%s168 + $0x4] sm:$0xf]
    %v171 = vunpack.c.l.bf16 %v169
    %v172 = vunpack.c.l.bf16 %v170
    %s173 = sld [smem:[#allocation6 + $0x7]]
    %v174 = vstv %s173
    %v175 = vmul.f32 %v171, %v174
    %v176 = vmul.f32 %v172, %v174
    %v177 = vadd.f32 %v160, %v175
    %v178 = vadd.f32 %v161, %v176
    %s179 = sld [smem:[#allocation6 + $0x17]]
    %v180 = vstv %s179
    %v181 = vmul.f32 %v171, %v180
    %v182 = vmul.f32 %v172, %v180
    %v183 = vadd.f32 %v166, %v181
    %v184 = vadd.f32 %v167, %v182
    %s185 = scalar_lea.vmem [#allocation2], 64
    %v186 = vld [vmem:[%s185] sm:$0xf]
    %v187 = vld [vmem:[%s185 + $0x4] sm:$0xf]
    %v188 = vunpack.c.l.bf16 %v186
    %v189 = vunpack.c.l.bf16 %v187
    %s190 = sld [smem:[#allocation6 + $0x8]]
    %v191 = vstv %s190
    %v192 = vmul.f32 %v188, %v191
    %v193 = vmul.f32 %v189, %v191
    %v194 = vadd.f32 %v177, %v192
    %v195 = vadd.f32 %v178, %v193
    %s196 = sld [smem:[#allocation6 + $0x18]]
    %v197 = vstv %s196
    %v198 = vmul.f32 %v188, %v197
    %v199 = vmul.f32 %v189, %v197
    %v200 = vadd.f32 %v183, %v198
    %v201 = vadd.f32 %v184, %v199
    %s202 = scalar_lea.vmem [#allocation2], 72
    %v203 = vld [vmem:[%s202] sm:$0xf]
    %v204 = vld [vmem:[%s202 + $0x4] sm:$0xf]
    %v205 = vunpack.c.l.bf16 %v203
    %v206 = vunpack.c.l.bf16 %v204
    %s207 = sld [smem:[#allocation6 + $0x9]]
    %v208 = vstv %s207
    %v209 = vmul.f32 %v205, %v208
    %v210 = vmul.f32 %v206, %v208
    %v211 = vadd.f32 %v194, %v209
    %v212 = vadd.f32 %v195, %v210
    %s213 = sld [smem:[#allocation6 + $0x19]]
    %v214 = vstv %s213
    %v215 = vmul.f32 %v205, %v214
    %v216 = vmul.f32 %v206, %v214
    %v217 = vadd.f32 %v200, %v215
    %v218 = vadd.f32 %v201, %v216
    %s219 = scalar_lea.vmem [#allocation2], 80
    %v220 = vld [vmem:[%s219] sm:$0xf]
    %v221 = vld [vmem:[%s219 + $0x4] sm:$0xf]
    %v222 = vunpack.c.l.bf16 %v220
    %v223 = vunpack.c.l.bf16 %v221
    %s224 = sld [smem:[#allocation6 + $0xa]]
    %v225 = vstv %s224
    %v226 = vmul.f32 %v222, %v225
    %v227 = vmul.f32 %v223, %v225
    %v228 = vadd.f32 %v211, %v226
    %v229 = vadd.f32 %v212, %v227
    %s230 = sld [smem:[#allocation6 + $0x1a]]
    %v231 = vstv %s230
    %v232 = vmul.f32 %v222, %v231
    %v233 = vmul.f32 %v223, %v231
    %v234 = vadd.f32 %v217, %v232
    %v235 = vadd.f32 %v218, %v233
    %s236 = scalar_lea.vmem [#allocation2], 88
    %v237 = vld [vmem:[%s236] sm:$0xf]
    %v238 = vld [vmem:[%s236 + $0x4] sm:$0xf]
    %v239 = vunpack.c.l.bf16 %v237
    %v240 = vunpack.c.l.bf16 %v238
    %s241 = sld [smem:[#allocation6 + $0xb]]
    %v242 = vstv %s241
    %v243 = vmul.f32 %v239, %v242
    %v244 = vmul.f32 %v240, %v242
    %v245 = vadd.f32 %v228, %v243
    %v246 = vadd.f32 %v229, %v244
    %s247 = sld [smem:[#allocation6 + $0x1b]]
    %v248 = vstv %s247
    %v249 = vmul.f32 %v239, %v248
    %v250 = vmul.f32 %v240, %v248
    %v251 = vadd.f32 %v234, %v249
    %v252 = vadd.f32 %v235, %v250
    %s253 = scalar_lea.vmem [#allocation2], 96
    %v254 = vld [vmem:[%s253] sm:$0xf]
    %v255 = vld [vmem:[%s253 + $0x4] sm:$0xf]
    %v256 = vunpack.c.l.bf16 %v254
    %v257 = vunpack.c.l.bf16 %v255
    %s258 = sld [smem:[#allocation6 + $0xc]]
    %v259 = vstv %s258
    %v260 = vmul.f32 %v256, %v259
    %v261 = vmul.f32 %v257, %v259
    %v262 = vadd.f32 %v245, %v260
    %v263 = vadd.f32 %v246, %v261
    %s264 = sld [smem:[#allocation6 + $0x1c]]
    %v265 = vstv %s264
    %v266 = vmul.f32 %v256, %v265
    %v267 = vmul.f32 %v257, %v265
    %v268 = vadd.f32 %v251, %v266
    %v269 = vadd.f32 %v252, %v267
    %s270 = scalar_lea.vmem [#allocation2], 104
    %v271 = vld [vmem:[%s270] sm:$0xf]
    %v272 = vld [vmem:[%s270 + $0x4] sm:$0xf]
    %v273 = vunpack.c.l.bf16 %v271
    %v274 = vunpack.c.l.bf16 %v272
    %s275 = sld [smem:[#allocation6 + $0xd]]
    %v276 = vstv %s275
    %v277 = vmul.f32 %v273, %v276
    %v278 = vmul.f32 %v274, %v276
    %v279 = vadd.f32 %v262, %v277
    %v280 = vadd.f32 %v263, %v278
    %s281 = sld [smem:[#allocation6 + $0x1d]]
    %v282 = vstv %s281
    %v283 = vmul.f32 %v273, %v282
    %v284 = vmul.f32 %v274, %v282
    %v285 = vadd.f32 %v268, %v283
    %v286 = vadd.f32 %v269, %v284
    %s287 = scalar_lea.vmem [#allocation2], 112
    %v288 = vld [vmem:[%s287] sm:$0xf]
    %v289 = vld [vmem:[%s287 + $0x4] sm:$0xf]
    %v290 = vunpack.c.l.bf16 %v288
    %v291 = vunpack.c.l.bf16 %v289
    %s292 = sld [smem:[#allocation6 + $0xe]]
    %v293 = vstv %s292
    %v294 = vmul.f32 %v290, %v293
    %v295 = vmul.f32 %v291, %v293
    %v296 = vadd.f32 %v279, %v294
    %v297 = vadd.f32 %v280, %v295
    %s298 = sld [smem:[#allocation6 + $0x1e]]
    %v299 = vstv %s298
    %v300 = vmul.f32 %v290, %v299
    %v301 = vmul.f32 %v291, %v299
    %v302 = vadd.f32 %v285, %v300
    %v303 = vadd.f32 %v286, %v301
    %s304 = scalar_lea.vmem [#allocation2], 120
    %v305 = vld [vmem:[%s304] sm:$0xf]
    %v306 = vld [vmem:[%s304 + $0x4] sm:$0xf]
    %v307 = vunpack.c.l.bf16 %v305
    %v308 = vunpack.c.l.bf16 %v306
    %s309 = sld [smem:[#allocation6 + $0xf]]
    %v310 = vstv %s309
    %v311 = vmul.f32 %v307, %v310
    %v312 = vmul.f32 %v308, %v310
    %v313 = vadd.f32 %v296, %v311
    %v314 = vadd.f32 %v297, %v312
    %s315 = sld [smem:[#allocation6 + $0x1f]]
    %v316 = vstv %s315
    %v317 = vmul.f32 %v307, %v316
    %v318 = vmul.f32 %v308, %v316
    %v319 = vadd.f32 %v302, %v317
    %v320 = vadd.f32 %v303, %v318
    %v321 = vand.u32 2147483647, %v313
    %vm322 = vcmp.le.f32.partialorder %v321, 0.7853982
    %vm323 = vcmp.lt.s32.totalorder %v313, 0
    %v324 = vand.u32 %v313, 2139095040
    %v325 = vshrl.u32 %v324, 23
    %v326 = vsub.s32 %v325, 127
    %v327 = vand.u32 2147483647, %v313
    %v328 = vand.u32 %v327, 8388607
    %v329 = vor.u32 %v328, 8388608
    %v330 = vsub.s32 0, %v329
    %v331 = vadd.s32 %v326, 1
    %vm332 = vcmp.gt.s32.totalorder %v331, 0
    %v333 = vsel %vm332, %v331, 0
    %v334 = vshrl.u32 %v333, 5
    %v335 = vand.u32 %v333, 31
    %v336 = vsub.s32 32, %v335
    %v337 = vshrl.u32 683565275, %v336
    %v338 = vshll.u32 683565275, %v335
    %v339 = vshrl.u32 2475754826, %v336
    %v340 = vor.u32 %v338, %v339
    %v341 = vshll.u32 2475754826, %v335
    %v342 = vshrl.u32 2131351028, %v336
    %v343 = vor.u32 %v341, %v342
    %v344 = vshll.u32 2131351028, %v335
    %v345 = vshrl.u32 2102212464, %v336
    %v346 = vor.u32 %v344, %v345
    %v347 = vshll.u32 2102212464, %v335
    %v348 = vshrl.u32 920167782, %v336
    %v349 = vor.u32 %v347, %v348
    %v350 = vshll.u32 920167782, %v335
    %v351 = vshrl.u32 1326507024, %v336
    %v352 = vor.u32 %v350, %v351
    %vm353 = vcmp.lt.s32.totalorder %v334, 1
    %vm354 = vcmp.lt.s32.totalorder %v334, 2
    %vm355 = vcmp.lt.s32.totalorder %v334, 3
    %vm356 = vcmp.lt.s32.totalorder %v334, 4
    %v357 = vsel %vm353, %v337, %v340
    %v358 = vsel %vm356, %v346, 2102212464
    %v359 = vsel %vm355, %v343, %v358
    %v360 = vsel %vm354, %v357, %v359
    %v361 = vsel %vm353, %v340, %v343
    %v362 = vsel %vm356, %v349, 920167782
    %v363 = vsel %vm355, %v346, %v362
    %v364 = vsel %vm354, %v361, %v363
    %v365 = vsel %vm353, %v343, %v346
    %v366 = vsel %vm356, %v352, 1326507024
    %v367 = vsel %vm355, %v349, %v366
    %v368 = vsel %vm354, %v365, %v367
    %v369 = vshll.u32 %v329, 8
    %v370 = vmul.u32.u64.compose %v369, %v368
    %v371 = vextract.low.u32 %v370
    %v372 = vextract.high.u32 %v370
    %v373 = vmul.u32.u64.compose %v369, %v364
    %v374 = vextract.low.u32 %v373
    %v375 = vextract.high.u32 %v373
    %v376 = vmul.u32 %v369, %v360
    %v377 = vadd.s32 %v372, %v374
    %vm378 = vc.u32 %v372, %v374
    %v379 = vadd.s32 %v375, 1
    %v380 = vsel %vm378, %v379, %v375
    %v381 = vadd.s32 %v376, %v380
    %v382 = vadd.s32 %v381, 536870912
    %v383 = vshrl.u32 %v382, 30
    %v384 = vshll.u32 %v383, 30
    %v385 = vsub.s32 %v381, %v384
    %vm386 = vcmp.lt.s32.totalorder %v385, 0
    %v387 = vsub.s32 0, %v385
    %v388 = vsel %vm386, %v387, %v385
    %v389 = vclz %v388
    %v390 = vsub.s32 %v389, 2
    %vm391 = vcmp.gt.s32.totalorder 0, %v390
    %v392 = vsel %vm391, 0, %v390
    %v393 = vsub.s32 32, %v392
    %v394 = vshll.u32 %v385, %v392
    %v395 = vshrl.u32 %v377, %v393
    %v396 = vor.u32 %v394, %v395
    %v397 = vsub.s32 4294967266, %v392
    %v398 = vadd.s32 %v397, 127
    %v399 = vshll.u32 %v398, 23
    %v400 = vor.u32 4788187, %v399
    %v401 = vand.u32 2147483647, %v400
    %v403 = vcvt.s32.f32 %v396
    %v404 = vmul.f32 %v403, %v401
    %v405 = vxor.u32 %v404, 2147483648
    %v406 = vsel %vm323, %v405, %v404
    %v407 = vsub.s32 4, %v383
    %v408 = vsel %vm323, %v407, %v383
    %v409 = vsel %vm322, %v313, %v406
    %v410 = vsel %vm322, 0, %v408
    %v411 = vcosq.f32.pop %v409
    %v412 = vsinq.f32.pop %v409
    %vm413 = vweird.f32 %v313
    %v414 = vand.u32 %v410, 3
    %vm415 = vcmp.lt.s32.totalorder %v414, 2
    %vm416 = vcmp.eq.s32.totalorder %v414, 0
    %v417 = vxor.u32 %v412, 2147483648
    %v418 = vsel %vm416, %v411, %v417
    %vm419 = vcmp.eq.s32.totalorder %v414, 2
    %v420 = vxor.u32 %v411, 2147483648
    %v421 = vsel %vm419, %v420, %v412
    %v422 = vsel %vm415, %v418, %v421
    %v423 = vsel %vm413, nan, %v422
    %v424 = vand.u32 2147483647, %v314
    %vm425 = vcmp.le.f32.partialorder %v424, 0.7853982
    %vm426 = vcmp.lt.s32.totalorder %v314, 0
    %v427 = vand.u32 %v314, 2139095040
    %v428 = vshrl.u32 %v427, 23
    %v429 = vsub.s32 %v428, 127
    %v430 = vand.u32 2147483647, %v314
    %v431 = vand.u32 %v430, 8388607
    %v432 = vor.u32 %v431, 8388608
    %v433 = vsub.s32 0, %v432
    %v434 = vadd.s32 %v429, 1
    %vm435 = vcmp.gt.s32.totalorder %v434, 0
    %v436 = vsel %vm435, %v434, 0
    %v437 = vshrl.u32 %v436, 5
    %v438 = vand.u32 %v436, 31
    %v439 = vsub.s32 32, %v438
    %v440 = vshrl.u32 683565275, %v439
    %v441 = vshll.u32 683565275, %v438
    %v442 = vshrl.u32 2475754826, %v439
    %v443 = vor.u32 %v441, %v442
    %v444 = vshll.u32 2475754826, %v438
    %v445 = vshrl.u32 2131351028, %v439
    %v446 = vor.u32 %v444, %v445
    %v447 = vshll.u32 2131351028, %v438
    %v448 = vshrl.u32 2102212464, %v439
    %v449 = vor.u32 %v447, %v448
    %v450 = vshll.u32 2102212464, %v438
    %v451 = vshrl.u32 920167782, %v439
    %v452 = vor.u32 %v450, %v451
    %v453 = vshll.u32 920167782, %v438
    %v454 = vshrl.u32 1326507024, %v439
    %v455 = vor.u32 %v453, %v454
    %vm456 = vcmp.lt.s32.totalorder %v437, 1
    %vm457 = vcmp.lt.s32.totalorder %v437, 2
    %vm458 = vcmp.lt.s32.totalorder %v437, 3
    %vm459 = vcmp.lt.s32.totalorder %v437, 4
    %v460 = vsel %vm456, %v440, %v443
    %v461 = vsel %vm459, %v449, 2102212464
    %v462 = vsel %vm458, %v446, %v461
    %v463 = vsel %vm457, %v460, %v462
    %v464 = vsel %vm456, %v443, %v446
    %v465 = vsel %vm459, %v452, 920167782
    %v466 = vsel %vm458, %v449, %v465
    %v467 = vsel %vm457, %v464, %v466
    %v468 = vsel %vm456, %v446, %v449
    %v469 = vsel %vm459, %v455, 1326507024
    %v470 = vsel %vm458, %v452, %v469
    %v471 = vsel %vm457, %v468, %v470
    %v472 = vshll.u32 %v432, 8
    %v473 = vmul.u32.u64.compose %v472, %v471
    %v474 = vextract.low.u32 %v473
    %v475 = vextract.high.u32 %v473
    %v476 = vmul.u32.u64.compose %v472, %v467
    %v477 = vextract.low.u32 %v476
    %v478 = vextract.high.u32 %v476
    %v479 = vmul.u32 %v472, %v463
    %v480 = vadd.s32 %v475, %v477
    %vm481 = vc.u32 %v475, %v477
    %v482 = vadd.s32 %v478, 1
    %v483 = vsel %vm481, %v482, %v478
    %v484 = vadd.s32 %v479, %v483
    %v485 = vadd.s32 %v484, 536870912
    %v486 = vshrl.u32 %v485, 30
    %v487 = vshll.u32 %v486, 30
    %v488 = vsub.s32 %v484, %v487
    %vm489 = vcmp.lt.s32.totalorder %v488, 0
    %v490 = vsub.s32 0, %v488
    %v491 = vsel %vm489, %v490, %v488
    %v492 = vclz %v491
    %v493 = vsub.s32 %v492, 2
    %vm494 = vcmp.gt.s32.totalorder 0, %v493
    %v495 = vsel %vm494, 0, %v493
    %v496 = vsub.s32 32, %v495
    %v497 = vshll.u32 %v488, %v495
    %v498 = vshrl.u32 %v480, %v496
    %v499 = vor.u32 %v497, %v498
    %v500 = vsub.s32 4294967266, %v495
    %v501 = vadd.s32 %v500, 127
    %v502 = vshll.u32 %v501, 23
    %v503 = vor.u32 4788187, %v502
    %v504 = vand.u32 2147483647, %v503
    %v506 = vcvt.s32.f32 %v499
    %v507 = vmul.f32 %v506, %v504
    %v508 = vxor.u32 %v507, 2147483648
    %v509 = vsel %vm426, %v508, %v507
    %v510 = vsub.s32 4, %v486
    %v511 = vsel %vm426, %v510, %v486
    %v512 = vsel %vm425, %v314, %v509
    %v513 = vsel %vm425, 0, %v511
    %v514 = vcosq.f32.pop %v512
    %v515 = vsinq.f32.pop %v512
    %vm516 = vweird.f32 %v314
    %v517 = vand.u32 %v513, 3
    %vm518 = vcmp.lt.s32.totalorder %v517, 2
    %vm519 = vcmp.eq.s32.totalorder %v517, 0
    %v520 = vxor.u32 %v515, 2147483648
    %v521 = vsel %vm519, %v514, %v520
    %vm522 = vcmp.eq.s32.totalorder %v517, 2
    %v523 = vxor.u32 %v514, 2147483648
    %v524 = vsel %vm522, %v523, %v515
    %v525 = vsel %vm518, %v521, %v524
    %v526 = vsel %vm516, nan, %v525
    %v527 = vand.u32 2147483647, %v313
    %vm528 = vcmp.le.f32.partialorder %v527, 0.7853982
    %vm529 = vcmp.lt.s32.totalorder %v313, 0
    %v530 = vand.u32 %v313, 2139095040
    %v531 = vshrl.u32 %v530, 23
    %v532 = vsub.s32 %v531, 127
    %v533 = vand.u32 2147483647, %v313
    %v534 = vand.u32 %v533, 8388607
    %v535 = vor.u32 %v534, 8388608
    %v536 = vsub.s32 0, %v535
    %v537 = vadd.s32 %v532, 1
    %vm538 = vcmp.gt.s32.totalorder %v537, 0
    %v539 = vsel %vm538, %v537, 0
    %v540 = vshrl.u32 %v539, 5
    %v541 = vand.u32 %v539, 31
    %v542 = vsub.s32 32, %v541
    %v543 = vshrl.u32 683565275, %v542
    %v544 = vshll.u32 683565275, %v541
    %v545 = vshrl.u32 2475754826, %v542
    %v546 = vor.u32 %v544, %v545
    %v547 = vshll.u32 2475754826, %v541
    %v548 = vshrl.u32 2131351028, %v542
    %v549 = vor.u32 %v547, %v548
    %v550 = vshll.u32 2131351028, %v541
    %v551 = vshrl.u32 2102212464, %v542
    %v552 = vor.u32 %v550, %v551
    %v553 = vshll.u32 2102212464, %v541
    %v554 = vshrl.u32 920167782, %v542
    %v555 = vor.u32 %v553, %v554
    %v556 = vshll.u32 920167782, %v541
    %v557 = vshrl.u32 1326507024, %v542
    %v558 = vor.u32 %v556, %v557
    %vm559 = vcmp.lt.s32.totalorder %v540, 1
    %vm560 = vcmp.lt.s32.totalorder %v540, 2
    %vm561 = vcmp.lt.s32.totalorder %v540, 3
    %vm562 = vcmp.lt.s32.totalorder %v540, 4
    %v563 = vsel %vm559, %v543, %v546
    %v564 = vsel %vm562, %v552, 2102212464
    %v565 = vsel %vm561, %v549, %v564
    %v566 = vsel %vm560, %v563, %v565
    %v567 = vsel %vm559, %v546, %v549
    %v568 = vsel %vm562, %v555, 920167782
    %v569 = vsel %vm561, %v552, %v568
    %v570 = vsel %vm560, %v567, %v569
    %v571 = vsel %vm559, %v549, %v552
    %v572 = vsel %vm562, %v558, 1326507024
    %v573 = vsel %vm561, %v555, %v572
    %v574 = vsel %vm560, %v571, %v573
    %v575 = vshll.u32 %v535, 8
    %v576 = vmul.u32.u64.compose %v575, %v574
    %v577 = vextract.low.u32 %v576
    %v578 = vextract.high.u32 %v576
    %v579 = vmul.u32.u64.compose %v575, %v570
    %v580 = vextract.low.u32 %v579
    %v581 = vextract.high.u32 %v579
    %v582 = vmul.u32 %v575, %v566
    %v583 = vadd.s32 %v578, %v580
    %vm584 = vc.u32 %v578, %v580
    %v585 = vadd.s32 %v581, 1
    %v586 = vsel %vm584, %v585, %v581
    %v587 = vadd.s32 %v582, %v586
    %v588 = vadd.s32 %v587, 536870912
    %v589 = vshrl.u32 %v588, 30
    %v590 = vshll.u32 %v589, 30
    %v591 = vsub.s32 %v587, %v590
    %vm592 = vcmp.lt.s32.totalorder %v591, 0
    %v593 = vsub.s32 0, %v591
    %v594 = vsel %vm592, %v593, %v591
    %v595 = vclz %v594
    %v596 = vsub.s32 %v595, 2
    %vm597 = vcmp.gt.s32.totalorder 0, %v596
    %v598 = vsel %vm597, 0, %v596
    %v599 = vsub.s32 32, %v598
    %v600 = vshll.u32 %v591, %v598
    %v601 = vshrl.u32 %v583, %v599
    %v602 = vor.u32 %v600, %v601
    %v603 = vsub.s32 4294967266, %v598
    %v604 = vadd.s32 %v603, 127
    %v605 = vshll.u32 %v604, 23
    %v606 = vor.u32 4788187, %v605
    %v607 = vand.u32 2147483647, %v606
    %v609 = vcvt.s32.f32 %v602
    %v610 = vmul.f32 %v609, %v607
    %v611 = vxor.u32 %v610, 2147483648
    %v612 = vsel %vm529, %v611, %v610
    %v613 = vsub.s32 4, %v589
    %v614 = vsel %vm529, %v613, %v589
    %v615 = vsel %vm528, %v313, %v612
    %v616 = vsel %vm528, 0, %v614
    %v617 = vcosq.f32.pop %v615
    %v618 = vsinq.f32.pop %v615
    %vm619 = vweird.f32 %v313
    %v620 = vadd.s32 %v616, 3
    %v621 = vand.u32 %v620, 3
    %vm622 = vcmp.lt.s32.totalorder %v621, 2
    %vm623 = vcmp.eq.s32.totalorder %v621, 0
    %v624 = vxor.u32 %v618, 2147483648
    %v625 = vsel %vm623, %v617, %v624
    %vm626 = vcmp.eq.s32.totalorder %v621, 2
    %v627 = vxor.u32 %v617, 2147483648
    %v628 = vsel %vm626, %v627, %v618
    %v629 = vsel %vm622, %v625, %v628
    %v630 = vsel %vm619, nan, %v629
    %v631 = vand.u32 2147483647, %v314
    %vm632 = vcmp.le.f32.partialorder %v631, 0.7853982
    %vm633 = vcmp.lt.s32.totalorder %v314, 0
    %v634 = vand.u32 %v314, 2139095040
    %v635 = vshrl.u32 %v634, 23
    %v636 = vsub.s32 %v635, 127
    %v637 = vand.u32 2147483647, %v314
    %v638 = vand.u32 %v637, 8388607
    %v639 = vor.u32 %v638, 8388608
    %v640 = vsub.s32 0, %v639
    %v641 = vadd.s32 %v636, 1
    %vm642 = vcmp.gt.s32.totalorder %v641, 0
    %v643 = vsel %vm642, %v641, 0
    %v644 = vshrl.u32 %v643, 5
    %v645 = vand.u32 %v643, 31
    %v646 = vsub.s32 32, %v645
    %v647 = vshrl.u32 683565275, %v646
    %v648 = vshll.u32 683565275, %v645
    %v649 = vshrl.u32 2475754826, %v646
    %v650 = vor.u32 %v648, %v649
    %v651 = vshll.u32 2475754826, %v645
    %v652 = vshrl.u32 2131351028, %v646
    %v653 = vor.u32 %v651, %v652
    %v654 = vshll.u32 2131351028, %v645
    %v655 = vshrl.u32 2102212464, %v646
    %v656 = vor.u32 %v654, %v655
    %v657 = vshll.u32 2102212464, %v645
    %v658 = vshrl.u32 920167782, %v646
    %v659 = vor.u32 %v657, %v658
    %v660 = vshll.u32 920167782, %v645
    %v661 = vshrl.u32 1326507024, %v646
    %v662 = vor.u32 %v660, %v661
    %vm663 = vcmp.lt.s32.totalorder %v644, 1
    %vm664 = vcmp.lt.s32.totalorder %v644, 2
    %vm665 = vcmp.lt.s32.totalorder %v644, 3
    %vm666 = vcmp.lt.s32.totalorder %v644, 4
    %v667 = vsel %vm663, %v647, %v650
    %v668 = vsel %vm666, %v656, 2102212464
    %v669 = vsel %vm665, %v653, %v668
    %v670 = vsel %vm664, %v667, %v669
    %v671 = vsel %vm663, %v650, %v653
    %v672 = vsel %vm666, %v659, 920167782
    %v673 = vsel %vm665, %v656, %v672
    %v674 = vsel %vm664, %v671, %v673
    %v675 = vsel %vm663, %v653, %v656
    %v676 = vsel %vm666, %v662, 1326507024
    %v677 = vsel %vm665, %v659, %v676
    %v678 = vsel %vm664, %v675, %v677
    %v679 = vshll.u32 %v639, 8
    %v680 = vmul.u32.u64.compose %v679, %v678
    %v681 = vextract.low.u32 %v680
    %v682 = vextract.high.u32 %v680
    %v683 = vmul.u32.u64.compose %v679, %v674
    %v684 = vextract.low.u32 %v683
    %v685 = vextract.high.u32 %v683
    %v686 = vmul.u32 %v679, %v670
    %v687 = vadd.s32 %v682, %v684
    %vm688 = vc.u32 %v682, %v684
    %v689 = vadd.s32 %v685, 1
    %v690 = vsel %vm688, %v689, %v685
    %v691 = vadd.s32 %v686, %v690
    %v692 = vadd.s32 %v691, 536870912
    %v693 = vshrl.u32 %v692, 30
    %v694 = vshll.u32 %v693, 30
    %v695 = vsub.s32 %v691, %v694
    %vm696 = vcmp.lt.s32.totalorder %v695, 0
    %v697 = vsub.s32 0, %v695
    %v698 = vsel %vm696, %v697, %v695
    %v699 = vclz %v698
    %v700 = vsub.s32 %v699, 2
    %vm701 = vcmp.gt.s32.totalorder 0, %v700
    %v702 = vsel %vm701, 0, %v700
    %v703 = vsub.s32 32, %v702
    %v704 = vshll.u32 %v695, %v702
    %v705 = vshrl.u32 %v687, %v703
    %v706 = vor.u32 %v704, %v705
    %v707 = vsub.s32 4294967266, %v702
    %v708 = vadd.s32 %v707, 127
    %v709 = vshll.u32 %v708, 23
    %v710 = vor.u32 4788187, %v709
    %v711 = vand.u32 2147483647, %v710
    %v713 = vcvt.s32.f32 %v706
    %v714 = vmul.f32 %v713, %v711
    %v715 = vxor.u32 %v714, 2147483648
    %v716 = vsel %vm633, %v715, %v714
    %v717 = vsub.s32 4, %v693
    %v718 = vsel %vm633, %v717, %v693
    %v719 = vsel %vm632, %v314, %v716
    %v720 = vsel %vm632, 0, %v718
    %v721 = vcosq.f32.pop %v719
    %v722 = vsinq.f32.pop %v719
    %vm723 = vweird.f32 %v314
    %v724 = vadd.s32 %v720, 3
    %v725 = vand.u32 %v724, 3
    %vm726 = vcmp.lt.s32.totalorder %v725, 2
    %vm727 = vcmp.eq.s32.totalorder %v725, 0
    %v728 = vxor.u32 %v722, 2147483648
    %v729 = vsel %vm727, %v721, %v728
    %vm730 = vcmp.eq.s32.totalorder %v725, 2
    %v731 = vxor.u32 %v721, 2147483648
    %v732 = vsel %vm730, %v731, %v722
    %v733 = vsel %vm726, %v729, %v732
    %v734 = vsel %vm723, nan, %v733
    %v735 = vand.u32 2147483647, %v319
    %vm736 = vcmp.le.f32.partialorder %v735, 0.7853982
    %vm737 = vcmp.lt.s32.totalorder %v319, 0
    %v738 = vand.u32 %v319, 2139095040
    %v739 = vshrl.u32 %v738, 23
    %v740 = vsub.s32 %v739, 127
    %v741 = vand.u32 2147483647, %v319
    %v742 = vand.u32 %v741, 8388607
    %v743 = vor.u32 %v742, 8388608
    %v744 = vsub.s32 0, %v743
    %v745 = vadd.s32 %v740, 1
    %vm746 = vcmp.gt.s32.totalorder %v745, 0
    %v747 = vsel %vm746, %v745, 0
    %v748 = vshrl.u32 %v747, 5
    %v749 = vand.u32 %v747, 31
    %v750 = vsub.s32 32, %v749
    %v751 = vshrl.u32 683565275, %v750
    %v752 = vshll.u32 683565275, %v749
    %v753 = vshrl.u32 2475754826, %v750
    %v754 = vor.u32 %v752, %v753
    %v755 = vshll.u32 2475754826, %v749
    %v756 = vshrl.u32 2131351028, %v750
    %v757 = vor.u32 %v755, %v756
    %v758 = vshll.u32 2131351028, %v749
    %v759 = vshrl.u32 2102212464, %v750
    %v760 = vor.u32 %v758, %v759
    %v761 = vshll.u32 2102212464, %v749
    %v762 = vshrl.u32 920167782, %v750
    %v763 = vor.u32 %v761, %v762
    %v764 = vshll.u32 920167782, %v749
    %v765 = vshrl.u32 1326507024, %v750
    %v766 = vor.u32 %v764, %v765
    %vm767 = vcmp.lt.s32.totalorder %v748, 1
    %vm768 = vcmp.lt.s32.totalorder %v748, 2
    %vm769 = vcmp.lt.s32.totalorder %v748, 3
    %vm770 = vcmp.lt.s32.totalorder %v748, 4
    %v771 = vsel %vm767, %v751, %v754
    %v772 = vsel %vm770, %v760, 2102212464
    %v773 = vsel %vm769, %v757, %v772
    %v774 = vsel %vm768, %v771, %v773
    %v775 = vsel %vm767, %v754, %v757
    %v776 = vsel %vm770, %v763, 920167782
    %v777 = vsel %vm769, %v760, %v776
    %v778 = vsel %vm768, %v775, %v777
    %v779 = vsel %vm767, %v757, %v760
    %v780 = vsel %vm770, %v766, 1326507024
    %v781 = vsel %vm769, %v763, %v780
    %v782 = vsel %vm768, %v779, %v781
    %v783 = vshll.u32 %v743, 8
    %v784 = vmul.u32.u64.compose %v783, %v782
    %v785 = vextract.low.u32 %v784
    %v786 = vextract.high.u32 %v784
    %v787 = vmul.u32.u64.compose %v783, %v778
    %v788 = vextract.low.u32 %v787
    %v789 = vextract.high.u32 %v787
    %v790 = vmul.u32 %v783, %v774
    %v791 = vadd.s32 %v786, %v788
    %vm792 = vc.u32 %v786, %v788
    %v793 = vadd.s32 %v789, 1
    %v794 = vsel %vm792, %v793, %v789
    %v795 = vadd.s32 %v790, %v794
    %v796 = vadd.s32 %v795, 536870912
    %v797 = vshrl.u32 %v796, 30
    %v798 = vshll.u32 %v797, 30
    %v799 = vsub.s32 %v795, %v798
    %vm800 = vcmp.lt.s32.totalorder %v799, 0
    %v801 = vsub.s32 0, %v799
    %v802 = vsel %vm800, %v801, %v799
    %v803 = vclz %v802
    %v804 = vsub.s32 %v803, 2
    %vm805 = vcmp.gt.s32.totalorder 0, %v804
    %v806 = vsel %vm805, 0, %v804
    %v807 = vsub.s32 32, %v806
    %v808 = vshll.u32 %v799, %v806
    %v809 = vshrl.u32 %v791, %v807
    %v810 = vor.u32 %v808, %v809
    %v811 = vsub.s32 4294967266, %v806
    %v812 = vadd.s32 %v811, 127
    %v813 = vshll.u32 %v812, 23
    %v814 = vor.u32 4788187, %v813
    %v815 = vand.u32 2147483647, %v814
    %v817 = vcvt.s32.f32 %v810
    %v818 = vmul.f32 %v817, %v815
    %v819 = vxor.u32 %v818, 2147483648
    %v820 = vsel %vm737, %v819, %v818
    %v821 = vsub.s32 4, %v797
    %v822 = vsel %vm737, %v821, %v797
    %v823 = vsel %vm736, %v319, %v820
    %v824 = vsel %vm736, 0, %v822
    %v825 = vcosq.f32.pop %v823
    %v826 = vsinq.f32.pop %v823
    %vm827 = vweird.f32 %v319
    %v828 = vand.u32 %v824, 3
    %vm829 = vcmp.lt.s32.totalorder %v828, 2
    %vm830 = vcmp.eq.s32.totalorder %v828, 0
    %v831 = vxor.u32 %v826, 2147483648
    %v832 = vsel %vm830, %v825, %v831
    %vm833 = vcmp.eq.s32.totalorder %v828, 2
    %v834 = vxor.u32 %v825, 2147483648
    %v835 = vsel %vm833, %v834, %v826
    %v836 = vsel %vm829, %v832, %v835
    %v837 = vsel %vm827, nan, %v836
    %v838 = vand.u32 2147483647, %v320
    %vm839 = vcmp.le.f32.partialorder %v838, 0.7853982
    %vm840 = vcmp.lt.s32.totalorder %v320, 0
    %v841 = vand.u32 %v320, 2139095040
    %v842 = vshrl.u32 %v841, 23
    %v843 = vsub.s32 %v842, 127
    %v844 = vand.u32 2147483647, %v320
    %v845 = vand.u32 %v844, 8388607
    %v846 = vor.u32 %v845, 8388608
    %v847 = vsub.s32 0, %v846
    %v848 = vadd.s32 %v843, 1
    %vm849 = vcmp.gt.s32.totalorder %v848, 0
    %v850 = vsel %vm849, %v848, 0
    %v851 = vshrl.u32 %v850, 5
    %v852 = vand.u32 %v850, 31
    %v853 = vsub.s32 32, %v852
    %v854 = vshrl.u32 683565275, %v853
    %v855 = vshll.u32 683565275, %v852
    %v856 = vshrl.u32 2475754826, %v853
    %v857 = vor.u32 %v855, %v856
    %v858 = vshll.u32 2475754826, %v852
    %v859 = vshrl.u32 2131351028, %v853
    %v860 = vor.u32 %v858, %v859
    %v861 = vshll.u32 2131351028, %v852
    %v862 = vshrl.u32 2102212464, %v853
    %v863 = vor.u32 %v861, %v862
    %v864 = vshll.u32 2102212464, %v852
    %v865 = vshrl.u32 920167782, %v853
    %v866 = vor.u32 %v864, %v865
    %v867 = vshll.u32 920167782, %v852
    %v868 = vshrl.u32 1326507024, %v853
    %v869 = vor.u32 %v867, %v868
    %vm870 = vcmp.lt.s32.totalorder %v851, 1
    %vm871 = vcmp.lt.s32.totalorder %v851, 2
    %vm872 = vcmp.lt.s32.totalorder %v851, 3
    %vm873 = vcmp.lt.s32.totalorder %v851, 4
    %v874 = vsel %vm870, %v854, %v857
    %v875 = vsel %vm873, %v863, 2102212464
    %v876 = vsel %vm872, %v860, %v875
    %v877 = vsel %vm871, %v874, %v876
    %v878 = vsel %vm870, %v857, %v860
    %v879 = vsel %vm873, %v866, 920167782
    %v880 = vsel %vm872, %v863, %v879
    %v881 = vsel %vm871, %v878, %v880
    %v882 = vsel %vm870, %v860, %v863
    %v883 = vsel %vm873, %v869, 1326507024
    %v884 = vsel %vm872, %v866, %v883
    %v885 = vsel %vm871, %v882, %v884
    %v886 = vshll.u32 %v846, 8
    %v887 = vmul.u32.u64.compose %v886, %v885
    %v888 = vextract.low.u32 %v887
    %v889 = vextract.high.u32 %v887
    %v890 = vmul.u32.u64.compose %v886, %v881
    %v891 = vextract.low.u32 %v890
    %v892 = vextract.high.u32 %v890
    %v893 = vmul.u32 %v886, %v877
    %v894 = vadd.s32 %v889, %v891
    %vm895 = vc.u32 %v889, %v891
    %v896 = vadd.s32 %v892, 1
    %v897 = vsel %vm895, %v896, %v892
    %v898 = vadd.s32 %v893, %v897
    %v899 = vadd.s32 %v898, 536870912
    %v900 = vshrl.u32 %v899, 30
    %v901 = vshll.u32 %v900, 30
    %v902 = vsub.s32 %v898, %v901
    %vm903 = vcmp.lt.s32.totalorder %v902, 0
    %v904 = vsub.s32 0, %v902
    %v905 = vsel %vm903, %v904, %v902
    %v906 = vclz %v905
    %v907 = vsub.s32 %v906, 2
    %vm908 = vcmp.gt.s32.totalorder 0, %v907
    %v909 = vsel %vm908, 0, %v907
    %v910 = vsub.s32 32, %v909
    %v911 = vshll.u32 %v902, %v909
    %v912 = vshrl.u32 %v894, %v910
    %v913 = vor.u32 %v911, %v912
    %v914 = vsub.s32 4294967266, %v909
    %v915 = vadd.s32 %v914, 127
    %v916 = vshll.u32 %v915, 23
    %v917 = vor.u32 4788187, %v916
    %v918 = vand.u32 2147483647, %v917
    %v920 = vcvt.s32.f32 %v913
    %v921 = vmul.f32 %v920, %v918
    %v922 = vxor.u32 %v921, 2147483648
    %v923 = vsel %vm840, %v922, %v921
    %v924 = vsub.s32 4, %v900
    %v925 = vsel %vm840, %v924, %v900
    %v926 = vsel %vm839, %v320, %v923
    %v927 = vsel %vm839, 0, %v925
    %v928 = vcosq.f32.pop %v926
    %v929 = vsinq.f32.pop %v926
    %vm930 = vweird.f32 %v320
    %v931 = vand.u32 %v927, 3
    %vm932 = vcmp.lt.s32.totalorder %v931, 2
    %vm933 = vcmp.eq.s32.totalorder %v931, 0
    %v934 = vxor.u32 %v929, 2147483648
    %v935 = vsel %vm933, %v928, %v934
    %vm936 = vcmp.eq.s32.totalorder %v931, 2
    %v937 = vxor.u32 %v928, 2147483648
    %v938 = vsel %vm936, %v937, %v929
    %v939 = vsel %vm932, %v935, %v938
    %v940 = vsel %vm930, nan, %v939
    %v941 = vand.u32 2147483647, %v319
    %vm942 = vcmp.le.f32.partialorder %v941, 0.7853982
    %vm943 = vcmp.lt.s32.totalorder %v319, 0
    %v944 = vand.u32 %v319, 2139095040
    %v945 = vshrl.u32 %v944, 23
    %v946 = vsub.s32 %v945, 127
    %v947 = vand.u32 2147483647, %v319
    %v948 = vand.u32 %v947, 8388607
    %v949 = vor.u32 %v948, 8388608
    %v950 = vsub.s32 0, %v949
    %v951 = vadd.s32 %v946, 1
    %vm952 = vcmp.gt.s32.totalorder %v951, 0
    %v953 = vsel %vm952, %v951, 0
    %v954 = vshrl.u32 %v953, 5
    %v955 = vand.u32 %v953, 31
    %v956 = vsub.s32 32, %v955
    %v957 = vshrl.u32 683565275, %v956
    %v958 = vshll.u32 683565275, %v955
    %v959 = vshrl.u32 2475754826, %v956
    %v960 = vor.u32 %v958, %v959
    %v961 = vshll.u32 2475754826, %v955
    %v962 = vshrl.u32 2131351028, %v956
    %v963 = vor.u32 %v961, %v962
    %v964 = vshll.u32 2131351028, %v955
    %v965 = vshrl.u32 2102212464, %v956
    %v966 = vor.u32 %v964, %v965
    %v967 = vshll.u32 2102212464, %v955
    %v968 = vshrl.u32 920167782, %v956
    %v969 = vor.u32 %v967, %v968
    %v970 = vshll.u32 920167782, %v955
    %v971 = vshrl.u32 1326507024, %v956
    %v972 = vor.u32 %v970, %v971
    %vm973 = vcmp.lt.s32.totalorder %v954, 1
    %vm974 = vcmp.lt.s32.totalorder %v954, 2
    %vm975 = vcmp.lt.s32.totalorder %v954, 3
    %vm976 = vcmp.lt.s32.totalorder %v954, 4
    %v977 = vsel %vm973, %v957, %v960
    %v978 = vsel %vm976, %v966, 2102212464
    %v979 = vsel %vm975, %v963, %v978
    %v980 = vsel %vm974, %v977, %v979
    %v981 = vsel %vm973, %v960, %v963
    %v982 = vsel %vm976, %v969, 920167782
    %v983 = vsel %vm975, %v966, %v982
    %v984 = vsel %vm974, %v981, %v983
    %v985 = vsel %vm973, %v963, %v966
    %v986 = vsel %vm976, %v972, 1326507024
    %v987 = vsel %vm975, %v969, %v986
    %v988 = vsel %vm974, %v985, %v987
    %v989 = vshll.u32 %v949, 8
    %v990 = vmul.u32.u64.compose %v989, %v988
    %v991 = vextract.low.u32 %v990
    %v992 = vextract.high.u32 %v990
    %v993 = vmul.u32.u64.compose %v989, %v984
    %v994 = vextract.low.u32 %v993
    %v995 = vextract.high.u32 %v993
    %v996 = vmul.u32 %v989, %v980
    %v997 = vadd.s32 %v992, %v994
    %vm998 = vc.u32 %v992, %v994
    %v999 = vadd.s32 %v995, 1
    %v1000 = vsel %vm998, %v999, %v995
    %v1001 = vadd.s32 %v996, %v1000
    %v1002 = vadd.s32 %v1001, 536870912
    %v1003 = vshrl.u32 %v1002, 30
    %v1004 = vshll.u32 %v1003, 30
    %v1005 = vsub.s32 %v1001, %v1004
    %vm1006 = vcmp.lt.s32.totalorder %v1005, 0
    %v1007 = vsub.s32 0, %v1005
    %v1008 = vsel %vm1006, %v1007, %v1005
    %v1009 = vclz %v1008
    %v1010 = vsub.s32 %v1009, 2
    %vm1011 = vcmp.gt.s32.totalorder 0, %v1010
    %v1012 = vsel %vm1011, 0, %v1010
    %v1013 = vsub.s32 32, %v1012
    %v1014 = vshll.u32 %v1005, %v1012
    %v1015 = vshrl.u32 %v997, %v1013
    %v1016 = vor.u32 %v1014, %v1015
    %v1017 = vsub.s32 4294967266, %v1012
    %v1018 = vadd.s32 %v1017, 127
    %v1019 = vshll.u32 %v1018, 23
    %v1020 = vor.u32 4788187, %v1019
    %v1021 = vand.u32 2147483647, %v1020
    %v1023 = vcvt.s32.f32 %v1016
    %v1024 = vmul.f32 %v1023, %v1021
    %v1025 = vxor.u32 %v1024, 2147483648
    %v1026 = vsel %vm943, %v1025, %v1024
    %v1027 = vsub.s32 4, %v1003
    %v1028 = vsel %vm943, %v1027, %v1003
    %v1029 = vsel %vm942, %v319, %v1026
    %v1030 = vsel %vm942, 0, %v1028
    %v1031 = vcosq.f32.pop %v1029
    %v1032 = vsinq.f32.pop %v1029
    %vm1033 = vweird.f32 %v319
    %v1034 = vadd.s32 %v1030, 3
    %v1035 = vand.u32 %v1034, 3
    %vm1036 = vcmp.lt.s32.totalorder %v1035, 2
    %vm1037 = vcmp.eq.s32.totalorder %v1035, 0
    %v1038 = vxor.u32 %v1032, 2147483648
    %v1039 = vsel %vm1037, %v1031, %v1038
    %vm1040 = vcmp.eq.s32.totalorder %v1035, 2
    %v1041 = vxor.u32 %v1031, 2147483648
    %v1042 = vsel %vm1040, %v1041, %v1032
    %v1043 = vsel %vm1036, %v1039, %v1042
    %v1044 = vsel %vm1033, nan, %v1043
    %v1045 = vand.u32 2147483647, %v320
    %vm1046 = vcmp.le.f32.partialorder %v1045, 0.7853982
    %vm1047 = vcmp.lt.s32.totalorder %v320, 0
    %v1048 = vand.u32 %v320, 2139095040
    %v1049 = vshrl.u32 %v1048, 23
    %v1050 = vsub.s32 %v1049, 127
    %v1051 = vand.u32 2147483647, %v320
    %v1052 = vand.u32 %v1051, 8388607
    %v1053 = vor.u32 %v1052, 8388608
    %v1054 = vsub.s32 0, %v1053
    %v1055 = vadd.s32 %v1050, 1
    %vm1056 = vcmp.gt.s32.totalorder %v1055, 0
    %v1057 = vsel %vm1056, %v1055, 0
    %v1058 = vshrl.u32 %v1057, 5
    %v1059 = vand.u32 %v1057, 31
    %v1060 = vsub.s32 32, %v1059
    %v1061 = vshrl.u32 683565275, %v1060
    %v1062 = vshll.u32 683565275, %v1059
    %v1063 = vshrl.u32 2475754826, %v1060
    %v1064 = vor.u32 %v1062, %v1063
    %v1065 = vshll.u32 2475754826, %v1059
    %v1066 = vshrl.u32 2131351028, %v1060
    %v1067 = vor.u32 %v1065, %v1066
    %v1068 = vshll.u32 2131351028, %v1059
    %v1069 = vshrl.u32 2102212464, %v1060
    %v1070 = vor.u32 %v1068, %v1069
    %v1071 = vshll.u32 2102212464, %v1059
    %v1072 = vshrl.u32 920167782, %v1060
    %v1073 = vor.u32 %v1071, %v1072
    %v1074 = vshll.u32 920167782, %v1059
    %v1075 = vshrl.u32 1326507024, %v1060
    %v1076 = vor.u32 %v1074, %v1075
    %vm1077 = vcmp.lt.s32.totalorder %v1058, 1
    %vm1078 = vcmp.lt.s32.totalorder %v1058, 2
    %vm1079 = vcmp.lt.s32.totalorder %v1058, 3
    %vm1080 = vcmp.lt.s32.totalorder %v1058, 4
    %v1081 = vsel %vm1077, %v1061, %v1064
    %v1082 = vsel %vm1080, %v1070, 2102212464
    %v1083 = vsel %vm1079, %v1067, %v1082
    %v1084 = vsel %vm1078, %v1081, %v1083
    %v1085 = vsel %vm1077, %v1064, %v1067
    %v1086 = vsel %vm1080, %v1073, 920167782
    %v1087 = vsel %vm1079, %v1070, %v1086
    %v1088 = vsel %vm1078, %v1085, %v1087
    %v1089 = vsel %vm1077, %v1067, %v1070
    %v1090 = vsel %vm1080, %v1076, 1326507024
    %v1091 = vsel %vm1079, %v1073, %v1090
    %v1092 = vsel %vm1078, %v1089, %v1091
    %v1093 = vshll.u32 %v1053, 8
    %v1094 = vmul.u32.u64.compose %v1093, %v1092
    %v1095 = vextract.low.u32 %v1094
    %v1096 = vextract.high.u32 %v1094
    %v1097 = vmul.u32.u64.compose %v1093, %v1088
    %v1098 = vextract.low.u32 %v1097
    %v1099 = vextract.high.u32 %v1097
    %v1100 = vmul.u32 %v1093, %v1084
    %v1101 = vadd.s32 %v1096, %v1098
    %vm1102 = vc.u32 %v1096, %v1098
    %v1103 = vadd.s32 %v1099, 1
    %v1104 = vsel %vm1102, %v1103, %v1099
    %v1105 = vadd.s32 %v1100, %v1104
    %v1106 = vadd.s32 %v1105, 536870912
    %v1107 = vshrl.u32 %v1106, 30
    %v1108 = vshll.u32 %v1107, 30
    %v1109 = vsub.s32 %v1105, %v1108
    %vm1110 = vcmp.lt.s32.totalorder %v1109, 0
    %v1111 = vsub.s32 0, %v1109
    %v1112 = vsel %vm1110, %v1111, %v1109
    %v1113 = vclz %v1112
    %v1114 = vsub.s32 %v1113, 2
    %vm1115 = vcmp.gt.s32.totalorder 0, %v1114
    %v1116 = vsel %vm1115, 0, %v1114
    %v1117 = vsub.s32 32, %v1116
    %v1118 = vshll.u32 %v1109, %v1116
    %v1119 = vshrl.u32 %v1101, %v1117
    %v1120 = vor.u32 %v1118, %v1119
    %v1121 = vsub.s32 4294967266, %v1116
    %v1122 = vadd.s32 %v1121, 127
    %v1123 = vshll.u32 %v1122, 23
    %v1124 = vor.u32 4788187, %v1123
    %v1125 = vand.u32 2147483647, %v1124
    %v1127 = vcvt.s32.f32 %v1120
    %v1128 = vmul.f32 %v1127, %v1125
    %v1129 = vxor.u32 %v1128, 2147483648
    %v1130 = vsel %vm1047, %v1129, %v1128
    %v1131 = vsub.s32 4, %v1107
    %v1132 = vsel %vm1047, %v1131, %v1107
    %v1133 = vsel %vm1046, %v320, %v1130
    %v1134 = vsel %vm1046, 0, %v1132
    %v1135 = vcosq.f32.pop %v1133
    %v1136 = vsinq.f32.pop %v1133
    %vm1137 = vweird.f32 %v320
    %v1138 = vadd.s32 %v1134, 3
    %v1139 = vand.u32 %v1138, 3
    %vm1140 = vcmp.lt.s32.totalorder %v1139, 2
    %vm1141 = vcmp.eq.s32.totalorder %v1139, 0
    %v1142 = vxor.u32 %v1136, 2147483648
    %v1143 = vsel %vm1141, %v1135, %v1142
    %vm1144 = vcmp.eq.s32.totalorder %v1139, 2
    %v1145 = vxor.u32 %v1135, 2147483648
    %v1146 = vsel %vm1144, %v1145, %v1136
    %v1147 = vsel %vm1140, %v1143, %v1146
    %v1148 = vsel %vm1137, nan, %v1147
    %v1149 = vmul.f32 %v423, %v837
    %v1150 = vmul.f32 %v526, %v940
    %v1151 = vmul.f32 %v423, %v1044
    %v1152 = vmul.f32 %v526, %v1148
    %v1153 = vmul.f32 %v630, %v1044
    %v1154 = vmul.f32 %v734, %v1148
    %v1155 = vmul.f32 %v630, %v837
    %v1156 = vmul.f32 %v734, %v940
    %s1157 = sld [smem:[#allocation7]]
    %s1158 = sld [smem:[#allocation7 + $0x1]]
    %s1159 = sld [smem:[#allocation7 + $0x2]]
    %s1160 = sld [smem:[#allocation7 + $0x3]]
    %v1161 = vstv %s1159
    %v1162 = vmul.f32 %v1161, %v1149
    %v1163 = vmul.f32 %v1161, %v1150
    %v1164 = vstv %s1160
    %v1165 = vmul.f32 %v1164, %v1151
    %v1166 = vmul.f32 %v1164, %v1152
    %v1167 = vsub.f32 %v1162, %v1165
    %v1168 = vsub.f32 %v1163, %v1166
    %v1169 = vmul.f32 %v1164, %v1149
    %v1170 = vmul.f32 %v1164, %v1150
    %v1171 = vmul.f32 %v1161, %v1151
    %v1172 = vmul.f32 %v1161, %v1152
    %v1173 = vadd.f32 %v1169, %v1171
    %v1174 = vadd.f32 %v1170, %v1172
    %v1175 = vmul.f32 %v1161, %v1153
    %v1176 = vmul.f32 %v1161, %v1154
    %v1177 = vmul.f32 %v1164, %v1155
    %v1178 = vmul.f32 %v1164, %v1156
    %v1179 = vsub.f32 %v1175, %v1177
    %v1180 = vsub.f32 %v1176, %v1178
    %v1181 = vmul.f32 %v1164, %v1153
    %v1182 = vmul.f32 %v1164, %v1154
    %v1183 = vmul.f32 %v1161, %v1155
    %v1184 = vmul.f32 %v1161, %v1156
    %v1185 = vadd.f32 %v1181, %v1183
    %v1186 = vadd.f32 %v1182, %v1184
    %v1187 = vstv %s1157
    %v1188 = vmul.f32 %v1187, %v1167
    %v1189 = vmul.f32 %v1187, %v1168
    %v1190 = vstv %s1158
    %v1191 = vmul.f32 %v1190, %v1179
    %v1192 = vmul.f32 %v1190, %v1180
    %v1193 = vsub.f32 %v1188, %v1191
    %v1194 = vsub.f32 %v1189, %v1192
    %v1195 = vmul.f32 %v1190, %v1167
    %v1196 = vmul.f32 %v1190, %v1168
    %v1197 = vmul.f32 %v1187, %v1179
    %v1198 = vmul.f32 %v1187, %v1180
    %v1199 = vadd.f32 %v1195, %v1197
    %v1200 = vadd.f32 %v1196, %v1198
    %v1201 = vmul.f32 %v1187, %v1173
    %v1202 = vmul.f32 %v1187, %v1174
    %v1203 = vmul.f32 %v1190, %v1185
    %v1204 = vmul.f32 %v1190, %v1186
    %v1205 = vsub.f32 %v1201, %v1203
    %v1206 = vsub.f32 %v1202, %v1204
    %v1207 = vmul.f32 %v1190, %v1173
    %v1208 = vmul.f32 %v1190, %v1174
    %v1209 = vmul.f32 %v1187, %v1185
    %v1210 = vmul.f32 %v1187, %v1186
    %v1211 = vadd.f32 %v1207, %v1209
    %v1212 = vadd.f32 %v1208, %v1210
    %v1213 = vmul.f32 %v1193, %v1193
    %v1214 = vmul.f32 %v1194, %v1194
    %v1215 = vmul.f32 %v1205, %v1205
    %v1216 = vmul.f32 %v1206, %v1206
    %v1217 = vmul.f32 %v1199, %v1199
    %v1218 = vmul.f32 %v1200, %v1200
    %v1219 = vmul.f32 %v1211, %v1211
    %v1220 = vmul.f32 %v1212, %v1212
    %v1221 = vadd.f32 %v1213, %v1215
    %v1222 = vadd.f32 %v1214, %v1216
    %v1223 = vsub.f32 %v1221, %v1217
    %v1224 = vsub.f32 %v1222, %v1218
    %v1225 = vsub.f32 %v1223, %v1219
    %v1226 = vsub.f32 %v1224, %v1220
    %v1227 = vpack.c.bf16 %v1226, %v1225
    %v1229 = vunpack.c.l.b16 %v1227
    %v1230 = vunpack.c.h.b16 %v1227
    %v1231 = vpack.c.b16 %v1229, %v1229
    %v1232 = vpack.c.b16 %v1230, %v1230
    %1235 = vst [vmem:[#allocation9] sm:$0xf] %v1231
    %1236 = vst [vmem:[#allocation9 + $0x4] sm:$0xf] %v1232
    %v1237 = vsub.f32 %v1213, %v1215
    %v1238 = vsub.f32 %v1214, %v1216
    %v1239 = vadd.f32 %v1237, %v1217
    %v1240 = vadd.f32 %v1238, %v1218
    %v1241 = vsub.f32 %v1239, %v1219
    %v1242 = vsub.f32 %v1240, %v1220
    %v1243 = vpack.c.bf16 %v1242, %v1241
    %v1245 = vunpack.c.l.b16 %v1243
    %v1246 = vunpack.c.h.b16 %v1243
    %v1247 = vpack.c.b16 %v1245, %v1245
    %v1248 = vpack.c.b16 %v1246, %v1246
    %s1251 = scalar_lea.vmem [#allocation9], 8
    %1252 = vst [vmem:[%s1251] sm:$0xf] %v1247
    %1253 = vst [vmem:[%s1251 + $0x4] sm:$0xf] %v1248
    // Predicated region
    $region26: #{tpu_custom_call.1} parent=1 // pred_check
      _
    $region27: #{tpu_custom_call.1} parent=1 // pred_check_branch
      %1255 = sbr.rel (0) target = $region29
    $region28: #{tpu_custom_call.1} parent=1 // pred_region
      %s1257 = ssub.s32 256, 256
      %1258 = vsyncadd [#allocation4], %s1257
      %s1259 = sshll.u32 [#allocation9], 4
      %s1260 = int_to_ptr.vmem [resolvable:$true] %s1259
      %1265 = dma.vmem_to_hbm [thread:$0]  %s1260, 256, %s3, [#allocation4], 64, 64, 4
    $region29: #{tpu_custom_call.1} parent=1 // pred_fallthru
      _
    // Predicated region
    $region30: #{tpu_custom_call.1} parent=1 // pred_check
      _
    $region31: #{tpu_custom_call.1} parent=1 // pred_check_branch
      %1267 = sbr.rel (0) target = $region33
    $region32: #{tpu_custom_call.1} parent=1 // pred_region
      %1268 = dma.done [#allocation4], 256
    $region33: #{tpu_custom_call.1} parent=1 // pred_fallthru
      _
    %1269 = vsyncpa [#allocation3], 1
    %1270 = vsyncpa [#allocation4], 1
    %1271 = vsyncpa [#allocation5], 1
    %1272 = vsyncpa [#allocation8], 1

</llo_original>
